<compile_context>
chip_gen: v6e
topology: v6e:2x2x1
jax: 0.10.0
libtpu: 0.0.40
codegen_flags: <defaults>
</compile_context>

<pallas_src>
import functools

import numpy as np
import jax
import jax.numpy as jnp
from jax.experimental import pallas as pl
from jax.experimental.pallas import tpu as pltpu


# output slots of the fused kernel (per decoder layer)
#  0: entity-CE numerator      1: entity-CE denominator (sum of class weights)
#  2: relation-CE numerator    3: relation-CE denominator
#  4: cardinality |err| summed over the batch
#  5..8: correct counts (pred / sub / obj / rel matched rows)
#  9: box L1 sum              10: sum(1 - giou)
_NOUT = 11


def _fused_loss_kernel(pred_ref, pmeta_ref, sub_ref, smeta_ref, obj_ref, ometa_ref,
                       rel_ref, rmeta_ref, boxes_ref, lens_ref, out_ref):
    """One grid step == one decoder layer.  All logits arrive at native class
    width / native dtype and are upcast to f32 in-kernel."""
    f32 = jnp.float32

    def wce_acc(logits, meta, acc_tgt):
        # logits [n, C]; meta cols: 0 tgt, 1 loss_w, 2 w_t (class weight of tgt), 3 matched
        n, c = logits.shape
        tgt = meta[:, 0:1].astype(jnp.int32)
        loss_w = meta[:, 1:2]
        w_t = meta[:, 2:3]
        matched = meta[:, 3:4]
        lane = jax.lax.broadcasted_iota(jnp.int32, (n, c), 1)
        onehot = (lane == tgt).astype(f32)
        mx = jnp.max(logits, axis=-1, keepdims=True)
        lse = jnp.log(jnp.sum(jnp.exp(logits - mx), axis=-1, keepdims=True)) + mx
        logit_t = jnp.sum(logits * onehot, axis=-1, keepdims=True)
        nll = lse - logit_t                                     # -log softmax[tgt]
        num = jnp.sum(w_t * loss_w * nll)
        den = jnp.sum(w_t)
        # top-1 accuracy: first maximal lane (matches torch argmax/topk on ties),
        # int32 compare against the accuracy target.
        lane_f = lane.astype(f32)
        amax = jnp.min(jnp.where(logits >= mx, lane_f, float(c)),
                       axis=-1, keepdims=True).astype(jnp.int32)
        correct = jnp.sum((amax == acc_tgt.astype(jnp.int32)).astype(f32) * matched)
        return num, den, correct, amax

    pm = pmeta_ref[...]
    p_num, p_den, p_cor, _ = wce_acc(pred_ref[...].astype(f32), pm, pm[:, 0:1])
    sm = smeta_ref[...]
    s_num, s_den, s_cor, _ = wce_acc(sub_ref[...].astype(f32), sm, sm[:, 0:1])
    om = ometa_ref[...]
    o_num, o_den, o_cor, _ = wce_acc(obj_ref[...].astype(f32), om, om[:, 0:1])
    # relation meta cols: 0 tgt, 1 loss_w(=1), 2 w_t, 3 matched, 4 acc_tgt, 5 batch_id
    rm = rmeta_ref[...]
    rel = rel_ref[...].astype(f32)
    r_num, r_den, r_cor, r_amax = wce_acc(rel, rm[:, 0:4], rm[:, 4:5])

    # ---- cardinality: per-image count of relation queries with argmax != "no relation"
    n_rel, c_rel = rel.shape
    lens = lens_ref[...]                                        # [1, B]
    bsz = lens.shape[1]
    bid = rm[:, 5:6].astype(jnp.int32)
    non_empty = (r_amax != (c_rel - 1)).astype(f32)             # [n_rel, 1]
    bmask = (bid == jax.lax.broadcasted_iota(jnp.int32, (n_rel, bsz), 1)).astype(f32)
    card_pred = jnp.sum(non_empty * bmask, axis=0, keepdims=True)       # [1, B]
    card_err = jnp.sum(jnp.abs(card_pred - lens))

    # ---- boxes: sublanes 0..3 = src (cx,cy,w,h), 4..7 = tgt.  Padded columns hold
    # identical neutral boxes -> contribute exactly 0 to both terms.
    bx = boxes_ref[...].astype(f32)
    s = bx[0:4, :]
    t = bx[4:8, :]
    l1 = jnp.sum(jnp.abs(s - t))

    def xyxy(b):
        cx, cy, w, h = b[0:1, :], b[1:2, :], b[2:3, :], b[3:4, :]
        return cx - 0.5 * w, cy - 0.5 * h, cx + 0.5 * w, cy + 0.5 * h

    sx1, sy1, sx2, sy2 = xyxy(s)
    tx1, ty1, tx2, ty2 = xyxy(t)
    area_s = (sx2 - sx1) * (sy2 - sy1)
    area_t = (tx2 - tx1) * (ty2 - ty1)
    iw = jnp.maximum(jnp.minimum(sx2, tx2) - jnp.maximum(sx1, tx1), 0.0)
    ih = jnp.maximum(jnp.minimum(sy2, ty2) - jnp.maximum(sy1, ty1), 0.0)
    inter = iw * ih
    union = area_s + area_t - inter
    iou = inter / union
    enc_w = jnp.maximum(sx2, tx2) - jnp.minimum(sx1, tx1)
    enc_h = jnp.maximum(sy2, ty2) - jnp.minimum(sy1, ty1)
    enc = enc_w * enc_h
    giou = iou - (enc - union) / enc
    giou_sum = jnp.sum(1.0 - giou)

    out_ref[0, 0] = p_num + s_num + o_num
    out_ref[0, 1] = p_den + s_den + o_den
    out_ref[0, 2] = r_num
    out_ref[0, 3] = r_den
    out_ref[0, 4] = card_err
    out_ref[0, 5] = p_cor
    out_ref[0, 6] = s_cor
    out_ref[0, 7] = o_cor
    out_ref[0, 8] = r_cor
    out_ref[0, 9] = l1
    out_ref[0, 10] = giou_sum


@functools.partial(jax.jit, static_argnames=('has_valid_rels', 'n_ent_m', 'n_rel_m'))
def _reltr_fused_losses(dev, meta, empty_weight, empty_weight_rel, num_boxes,
                        *, has_valid_rels, n_ent_m, n_rel_m):
    """dev: dict of per-layer tuples of device arrays; meta: stacked [L, ...] host
    metadata from the matcher.  Returns a list (per layer) of loss dicts."""
    f32 = jnp.float32
    pred_logits = jnp.stack(dev['pred_logits'])                 # [L, B, Qe, Ce], native dtype
    sub_logits = jnp.stack(dev['sub_logits'])
    obj_logits = jnp.stack(dev['obj_logits'])
    rel_logits = jnp.stack(dev['rel_logits'])                   # [L, B, Qr, Cr]
    pred_boxes = jnp.stack(dev['pred_boxes']).astype(f32)
    sub_boxes = jnp.stack(dev['sub_boxes']).astype(f32)
    obj_boxes = jnp.stack(dev['obj_boxes']).astype(f32)

    L, B, Qe, Ce = pred_logits.shape
    Qr = sub_logits.shape[2]
    Cr = rel_logits.shape[3]

    ew = empty_weight.astype(f32)
    ewr = empty_weight_rel.astype(f32)

    tgt_ent = meta['tgt_ent']
    ent_matched = meta['ent_matched']
    rel_matched = meta['rel_matched']
    acc_rel_tgt = meta['tgt_rel'].astype(f32)                   # accuracy target for rel rows

    if has_valid_rels:
        tgt_sub = meta['tgt_sub']
        tgt_obj = meta['tgt_obj']
        tgt_rel = meta['tgt_rel']
        sub_lw = meta['sub_lw']
        obj_lw = meta['obj_lw']
    else:
        # reference: CE targets become the network's own argmax, sub/obj rows get 0 loss weight
        tgt_sub = jnp.argmax(sub_logits, axis=-1).astype(jnp.int32)
        tgt_obj = jnp.argmax(obj_logits, axis=-1).astype(jnp.int32)
        tgt_rel = jnp.argmax(rel_logits, axis=-1).astype(jnp.int32)
        sub_lw = jnp.zeros((L, B, Qr), f32)
        obj_lw = jnp.zeros((L, B, Qr), f32)

    def pack_ent_meta(tgt, lw, matched, n):
        w_t = jnp.take(ew, tgt)                                 # per-row class weight
        return jnp.stack([tgt.astype(f32), lw, w_t, matched], axis=-1).reshape(L, n, 4)

    pmeta = pack_ent_meta(tgt_ent, jnp.ones((L, B, Qe), f32), ent_matched, B * Qe)
    smeta = pack_ent_meta(tgt_sub, sub_lw, rel_matched, B * Qr)
    ometa = pack_ent_meta(tgt_obj, obj_lw, rel_matched, B * Qr)

    bid = jnp.broadcast_to(jnp.arange(B, dtype=f32)[None, :, None], (L, B, Qr))
    w_t_rel = jnp.take(ewr, tgt_rel)
    rmeta = jnp.stack([tgt_rel.astype(f32), jnp.ones((L, B, Qr), f32), w_t_rel,
                       rel_matched, acc_rel_tgt, bid], axis=-1).reshape(L, B * Qr, 6)

    # matched boxes -> one [L, 8, NB] operand (src on sublanes 0..3, tgt on 4..7)
    def gather(boxes4, idx):
        flat = boxes4.reshape(L, -1, 4)
        idx3 = jnp.broadcast_to(idx[:, :, None], (L, idx.shape[1], 4))
        return jnp.take_along_axis(flat, idx3, axis=1)

    ent_src = gather(pred_boxes, meta['ent_idx'])
    sub_src = gather(sub_boxes, meta['rel_idx'])
    obj_src = gather(obj_boxes, meta['rel_idx'])
    src_b = jnp.concatenate([ent_src, sub_src, obj_src], axis=1)
    if has_valid_rels:
        tgt_b = jnp.concatenate([meta['tgt_ent_boxes'], meta['tgt_sub_boxes'],
                                 meta['tgt_obj_boxes']], axis=1).astype(f32)
    else:
        tgt_b = jnp.concatenate([meta['tgt_ent_boxes'].astype(f32), sub_src, obj_src], axis=1)
    valid = jnp.concatenate([meta['ent_valid'], meta['rel_valid'], meta['rel_valid']],
                            axis=1)[:, :, None]
    neutral = jnp.array([0.5, 0.5, 1.0, 1.0], f32)
    src_b = jnp.where(valid > 0, src_b, neutral)
    tgt_b = jnp.where(valid > 0, tgt_b, neutral)
    boxes = jnp.swapaxes(jnp.concatenate([src_b, tgt_b], axis=-1), 1, 2)    # [L, 8, NB]
    NB = boxes.shape[2]

    lens = meta['tgt_lengths'].astype(f32).reshape(1, B)

    pred_flat = pred_logits.reshape(L, B * Qe, Ce)
    sub_flat = sub_logits.reshape(L, B * Qr, Ce)
    obj_flat = obj_logits.reshape(L, B * Qr, Ce)
    rel_flat = rel_logits.reshape(L, B * Qr, Cr)

    out = pl.pallas_call(
        _fused_loss_kernel,
        grid=(L,),
        in_specs=[
            pl.BlockSpec((None, B * Qe, Ce), lambda l: (l, 0, 0)),
            pl.BlockSpec((None, B * Qe, 4), lambda l: (l, 0, 0)),
            pl.BlockSpec((None, B * Qr, Ce), lambda l: (l, 0, 0)),
            pl.BlockSpec((None, B * Qr, 4), lambda l: (l, 0, 0)),
            pl.BlockSpec((None, B * Qr, Ce), lambda l: (l, 0, 0)),
            pl.BlockSpec((None, B * Qr, 4), lambda l: (l, 0, 0)),
            pl.BlockSpec((None, B * Qr, Cr), lambda l: (l, 0, 0)),
            pl.BlockSpec((None, B * Qr, 6), lambda l: (l, 0, 0)),
            pl.BlockSpec((None, 8, NB), lambda l: (l, 0, 0)),
            pl.BlockSpec((1, B), lambda l: (0, 0)),
        ],
        out_specs=pl.BlockSpec((None, 1, _NOUT), lambda l: (l, 0, 0),
                               memory_space=pltpu.MemorySpace.SMEM),
        out_shape=jax.ShapeDtypeStruct((L, 1, _NOUT), jnp.float32),
        # layers are independent -> let v7x's two TensorCores split them; a no-op on v5e/v6e.
        compiler_params=pltpu.CompilerParams(dimension_semantics=("parallel",)),
    )(pred_flat, pmeta, sub_flat, smeta, obj_flat, ometa, rel_flat, rmeta, boxes, lens)

    out = out.reshape(L, _NOUT)
    nb = jnp.maximum(num_boxes, 1.0)
    zero = jnp.asarray(0.0, f32)

    def err_pct(count, n):
        if n == 0:                       # torch accuracy([]) == 0  ->  error 100
            return jnp.asarray(100.0, f32)
        return 100.0 - 100.0 * count / n

    per_layer = []
    for l in range(L):
        o = out[l]
        per_layer.append({
            'loss_ce': o[0] / o[1],
            'loss_rel': (o[2] / o[3]) if has_valid_rels else zero,
            'cardinality_error': o[4] / B,
            'class_error': err_pct(o[5], n_ent_m[l]),
            'sub_error': err_pct(o[6], n_rel_m[l]) if has_valid_rels else zero,
            'obj_error': err_pct(o[7], n_rel_m[l]) if has_valid_rels else zero,
            'rel_error': err_pct(o[8], n_rel_m[l]),
            'loss_bbox': o[9] / nb,
            'loss_giou': o[10] / nb,
        })
    return per_layer


# ----------------------------------------------------------------------------
# SetCriterion (JAX/Pallas version)
# ----------------------------------------------------------------------------

class SetCriterionPallas:
    def __init__(self, num_classes, num_rel_classes, matcher, weight_dict, eos_coef, losses):
        self.num_classes = num_classes
        self.num_rel_classes = num_rel_classes      # the reference hardcodes 20; pass 20
        self.matcher = matcher
        self.weight_dict = weight_dict
        self.eos_coef = eos_coef
        self.losses = losses
        self.empty_weight = jnp.ones((num_classes + 1,), jnp.float32).at[-1].set(eos_coef)
        self.empty_weight_rel = jnp.ones((num_rel_classes + 1,), jnp.float32).at[-1].set(eos_coef)
        self._per_layer = None

    # -------------------- helpers --------------------
    @staticmethod
    def _get_src_permutation_idx(indices):
        batch_idx = np.concatenate(
            [np.full(len(np.asarray(src)), i, np.int64) for i, (src, _) in enumerate(indices)])
        src_idx = np.concatenate([np.asarray(src, np.int64) for src, _ in indices])
        return batch_idx, src_idx

    @staticmethod
    def _has_valid_rels(targets):
        placeholder = np.full((1, 3), -1, dtype=np.int64)
        return not all(np.array_equal(np.asarray(t['rel_annotations']), placeholder)
                       for t in targets)

    @staticmethod
    def _num_boxes(targets):
        num_boxes = 0
        for t in targets:
            num_boxes += len(t['labels'])
            ra = np.asarray(t['rel_annotations'])
            if ra.size > 0 and not np.all(ra == -1):
                num_boxes += len(ra)
        # TODO(synk): torch.distributed.all_reduce(num_boxes); world size == 1 assumed.
        return max(float(num_boxes), 1.0)

    # -------------------- per-layer host metadata from matcher output --------
    def _layer_host_meta(self, targets, indices, B, Qe, Qr, has_valid_rels):
        nc, nrc = self.num_classes, self.num_rel_classes
        eb, es = self._get_src_permutation_idx(indices[0])
        rb, rs = self._get_src_permutation_idx(indices[1])

        tgt_ent = np.full((B, Qe), nc, np.int32)
        ent_matched = np.zeros((B, Qe), np.float32)
        if len(es):
            target_classes_o = np.concatenate(
                [np.asarray(t['labels'])[np.asarray(J)]
                 for t, (_, J) in zip(targets, indices[0])])
            tgt_ent[eb, es] = target_classes_o.astype(np.int32)
            ent_matched[eb, es] = 1.0

        tgt_sub = np.full((B, Qr), nc, np.int32)
        tgt_obj = np.full((B, Qr), nc, np.int32)
        tgt_rel = np.full((B, Qr), nrc, np.int32)
        rel_matched = np.zeros((B, Qr), np.float32)
        if len(rs):
            rel_matched[rb, rs] = 1.0
            rel_cls_o = np.concatenate(
                [np.asarray(t['rel_annotations'])[np.asarray(J), 2]
                 for t, (_, J) in zip(targets, indices[1])])
            tgt_rel[rb, rs] = rel_cls_o.astype(np.int32)
        if has_valid_rels and len(rs):
            sub_cls_o = np.concatenate(
                [np.asarray(t['labels'])[np.asarray(t['rel_annotations'])[np.asarray(J), 0]]
                 for t, (_, J) in zip(targets, indices[1])])
            obj_cls_o = np.concatenate(
                [np.asarray(t['labels'])[np.asarray(t['rel_annotations'])[np.asarray(J), 1]]
                 for t, (_, J) in zip(targets, indices[1])])
            tgt_sub[rb, rs] = sub_cls_o.astype(np.int32)
            tgt_obj[rb, rs] = obj_cls_o.astype(np.int32)

        if has_valid_rels and len(indices) > 3:
            sub_lw = np.asarray(indices[2], np.float32)
            obj_lw = np.asarray(indices[3], np.float32)
        elif has_valid_rels:
            sub_lw = np.ones((B, Qr), np.float32)
            obj_lw = np.ones((B, Qr), np.float32)
        else:
            sub_lw = np.zeros((B, Qr), np.float32)
            obj_lw = np.zeros((B, Qr), np.float32)

        ent_idx = (eb * Qe + es).astype(np.int32)
        rel_idx = (rb * Qr + rs).astype(np.int32)
        if len(es):
            tgt_ent_boxes = np.concatenate(
                [np.asarray(t['boxes'])[np.asarray(J)]
                 for t, (_, J) in zip(targets, indices[0])], axis=0).astype(np.float32)
        else:
            tgt_ent_boxes = np.zeros((0, 4), np.float32)
        if has_valid_rels and len(rs):
            tgt_sub_boxes = np.concatenate(
                [np.asarray(t['boxes'])[np.asarray(t['rel_annotations'])[np.asarray(J), 0]]
                 for t, (_, J) in zip(targets, indices[1])], axis=0).astype(np.float32)
            tgt_obj_boxes = np.concatenate(
                [np.asarray(t['boxes'])[np.asarray(t['rel_annotations'])[np.asarray(J), 1]]
                 for t, (_, J) in zip(targets, indices[1])], axis=0).astype(np.float32)
        else:
            tgt_sub_boxes = np.zeros((len(rs), 4), np.float32)  # unused: src reused on device
            tgt_obj_boxes = np.zeros((len(rs), 4), np.float32)

        return dict(tgt_ent=tgt_ent, tgt_sub=tgt_sub, tgt_obj=tgt_obj, tgt_rel=tgt_rel,
                    ent_matched=ent_matched, rel_matched=rel_matched,
                    sub_lw=sub_lw, obj_lw=obj_lw,
                    ent_idx=ent_idx, rel_idx=rel_idx,
                    tgt_ent_boxes=tgt_ent_boxes, tgt_sub_boxes=tgt_sub_boxes,
                    tgt_obj_boxes=tgt_obj_boxes,
                    n_ent_m=int(len(es)), n_rel_m=int(len(rs)))

    # -------------------- fused evaluation of ALL decoder layers --------------
    def _compute_all_layers(self, layer_outputs, targets, layer_indices, num_boxes):
        B, Qe = layer_outputs[0]['pred_logits'].shape[:2]
        Qr = layer_outputs[0]['sub_logits'].shape[1]
        has_valid_rels = self._has_valid_rels(targets)

        metas = [self._layer_host_meta(targets, idx, B, Qe, Qr, has_valid_rels)
                 for idx in layer_indices]
        n_ent_m = tuple(m['n_ent_m'] for m in metas)
        n_rel_m = tuple(m['n_rel_m'] for m in metas)
        NBe = max(1, max(n_ent_m))
        NBr = max(1, max(n_rel_m))

        def pad0(a, n, fill=0):
            k = a.shape[0]
            if k == n:
                return a
            return np.concatenate(
                [a, np.full((n - k,) + a.shape[1:], fill, a.dtype)], axis=0)

        meta = {
            'tgt_ent': np.stack([m['tgt_ent'] for m in metas]),
            'tgt_sub': np.stack([m['tgt_sub'] for m in metas]),
            'tgt_obj': np.stack([m['tgt_obj'] for m in metas]),
            'tgt_rel': np.stack([m['tgt_rel'] for m in metas]),
            'ent_matched': np.stack([m['ent_matched'] for m in metas]),
            'rel_matched': np.stack([m['rel_matched'] for m in metas]),
            'sub_lw': np.stack([m['sub_lw'] for m in metas]),
            'obj_lw': np.stack([m['obj_lw'] for m in metas]),
            'ent_idx': np.stack([pad0(m['ent_idx'], NBe) for m in metas]),
            'rel_idx': np.stack([pad0(m['rel_idx'], NBr) for m in metas]),
            'ent_valid': np.stack([pad0(np.ones((m['n_ent_m'],), np.float32), NBe)
                                   for m in metas]),
            'rel_valid': np.stack([pad0(np.ones((m['n_rel_m'],), np.float32), NBr)
                                   for m in metas]),
            'tgt_ent_boxes': np.stack([pad0(m['tgt_ent_boxes'], NBe, 0.5) for m in metas]),
            'tgt_sub_boxes': np.stack([pad0(m['tgt_sub_boxes'], NBr, 0.5) for m in metas]),
            'tgt_obj_boxes': np.stack([pad0(m['tgt_obj_boxes'], NBr, 0.5) for m in metas]),
            'tgt_lengths': np.array([len(t['rel_annotations']) for t in targets], np.float32),
        }
        dev = {k: tuple(lo[k] for lo in layer_outputs)
               for k in ('pred_logits', 'sub_logits', 'obj_logits', 'rel_logits',
                         'pred_boxes', 'sub_boxes', 'obj_boxes')}
        return _reltr_fused_losses(
            dev, meta, self.empty_weight, self.empty_weight_rel,
            jnp.asarray(num_boxes, jnp.float32),
            has_valid_rels=has_valid_rels, n_ent_m=n_ent_m, n_rel_m=n_rel_m)

    # -------------------- loss selection / forward --------------------
    def _select(self, loss, fused, log=True):
        if loss == 'labels':
            d = {'loss_ce': fused['loss_ce']}
            if log:
                d['class_error'] = fused['class_error']
                d['sub_error'] = fused['sub_error']
                d['obj_error'] = fused['obj_error']
            return d
        if loss == 'boxes':
            return {'loss_bbox': fused['loss_bbox'], 'loss_giou': fused['loss_giou']}
        if loss == 'relations':
            d = {'loss_rel': fused['loss_rel']}
            if log:
                d['rel_error'] = fused['rel_error']
            return d
        raise AssertionError(f'do you really want to compute {loss} loss?')

    def loss_cardinality(self, outputs, targets, indices=None, num_boxes=None):
        if self._per_layer is None:
            base = {k: v for k, v in outputs.items() if k != 'aux_outputs'}
            idx = indices if indices is not None else self.matcher(base, targets)
            self._per_layer = self._compute_all_layers([base], targets, [idx],
                                                       self._num_boxes(targets))
        return {'cardinality_error': self._per_layer[0]['cardinality_error']}

    def forward(self, outputs, targets):
        outputs_without_aux = {k: v for k, v in outputs.items() if k != 'aux_outputs'}
        indices = self.matcher(outputs_without_aux, targets)
        self.indices = indices
        num_boxes = self._num_boxes(targets)

        # main + every aux layer go through ONE fused pallas_call (grid over layers)
        layer_outputs = [outputs_without_aux]
        layer_indices = [indices]
        for aux in outputs.get('aux_outputs', []):
            layer_outputs.append(aux)
            layer_indices.append(self.matcher(aux, targets))

        per_layer = self._compute_all_layers(layer_outputs, targets, layer_indices, num_boxes)
        self._per_layer = per_layer

        losses = {}
        for loss in self.losses:
            losses.update(self._select(loss, per_layer[0], log=True))
        for i in range(1, len(per_layer)):
            for loss in self.losses:
                log = loss not in ('labels', 'relations')
                l_dict = self._select(loss, per_layer[i], log=log)
                losses.update({k + f'_{i - 1}': v for k, v in l_dict.items()})
        return losses


# ----------------------------------------------------------------------------
# Deterministic dummy matcher & example inputs
# ----------------------------------------------------------------------------

def dummy_matcher(outputs, targets):
    # TODO(synk): the real RelTR matcher solves a Hungarian assignment (scipy);
    # fixed deterministic assignments are returned here instead.
    ent_indices = [(np.array([0, 2, 4]), np.array([0, 1, 2])),
                   (np.array([1, 3, 5]), np.array([2, 0, 1]))]
    rel_indices = [(np.array([1, 5]), np.array([0, 1])),
                   (np.array([0, 3]), np.array([1, 0]))]
    B, Qr = outputs['sub_logits'].shape[:2]
    sub_weight = np.ones((B, Qr), np.float32)
    obj_weight = np.ones((B, Qr), np.float32)
    return ent_indices, rel_indices, sub_weight, obj_weight


def make_boxes(key, shape2d):
    kc, ks = jax.random.split(key)
    centers = jax.random.uniform(kc, shape2d + (2,), jnp.float32, 0.3, 0.7)
    sizes = jax.random.uniform(ks, shape2d + (2,), jnp.float32, 0.1, 0.3)
    return jnp.concatenate([centers, sizes], axis=-1)


if __name__ == "__main__":
    B, Qe, Qr = 2, 8, 8
    num_classes = 10          # entity logits last dim = 11
    num_rel_classes = 20      # relation logits last dim = 21

    def make_layer(key):
        ks = jax.random.split(key, 7)
        return {
            'pred_logits': jax.random.normal(ks[0], (B, Qe, num_classes + 1), jnp.float32),
            'pred_boxes': make_boxes(ks[1], (B, Qe)),
            'sub_logits': jax.random.normal(ks[2], (B, Qr, num_classes + 1), jnp.float32),
            'obj_logits': jax.random.normal(ks[3], (B, Qr, num_classes + 1), jnp.float32),
            'sub_boxes': make_boxes(ks[4], (B, Qr)),
            'obj_boxes': make_boxes(ks[5], (B, Qr)),
            'rel_logits': jax.random.normal(ks[6], (B, Qr, num_rel_classes + 1), jnp.float32),
        }

    key = jax.random.PRNGKey(0)
    k_main, k_a0, k_a1 = jax.random.split(key, 3)
    outputs = make_layer(k_main)
    outputs['aux_outputs'] = [make_layer(k_a0), make_layer(k_a1)]   # 3 layers total, 1 kernel call

    targets = [
        {'labels': np.array([1, 4, 7], dtype=np.int64),
         'boxes': np.array([[0.50, 0.50, 0.20, 0.20],
                            [0.30, 0.60, 0.15, 0.25],
                            [0.70, 0.40, 0.10, 0.30]], dtype=np.float32),
         'rel_annotations': np.array([[0, 1, 3], [1, 2, 7]], dtype=np.int64)},
        {'labels': np.array([2, 5, 9], dtype=np.int64),
         'boxes': np.array([[0.40, 0.45, 0.25, 0.20],
                            [0.60, 0.55, 0.20, 0.15],
                            [0.35, 0.65, 0.30, 0.10]], dtype=np.float32),
         'rel_annotations': np.array([[2, 0, 11], [1, 0, 5]], dtype=np.int64)},
    ]

    weight_dict = {'loss_ce': 1.0, 'loss_bbox': 5.0, 'loss_giou': 2.0, 'loss_rel': 1.0}
    criterion = SetCriterionPallas(num_classes, num_rel_classes, dummy_matcher,
                                   weight_dict, eos_coef=0.1,
                                   losses=['labels', 'boxes', 'relations'])

    losses = criterion.forward(outputs, targets)
    # loss_cardinality exists in the reference but is not wired into get_loss;
    # exercise it explicitly -- it reads the same fused result, no extra dispatch.
    losses.update(criterion.loss_cardinality(outputs, targets, criterion.indices, None))

    for v in losses.values():
        jax.block_until_ready(v)
    print("KERNEL_OK")
</pallas_src>

<mosaic_0001>
module attributes {stable_mosaic.version = 11 : i64} {
  func.func @_fused_loss_kernel(%arg0: i32, %arg1: memref<1x16x11xf32, #tpu.memory_space<vmem>>, %arg2: memref<1x16x4xf32, #tpu.memory_space<vmem>>, %arg3: memref<1x16x11xf32, #tpu.memory_space<vmem>>, %arg4: memref<1x16x4xf32, #tpu.memory_space<vmem>>, %arg5: memref<1x16x11xf32, #tpu.memory_space<vmem>>, %arg6: memref<1x16x4xf32, #tpu.memory_space<vmem>>, %arg7: memref<1x16x21xf32, #tpu.memory_space<vmem>>, %arg8: memref<1x16x6xf32, #tpu.memory_space<vmem>>, %arg9: memref<1x8x14xf32, #tpu.memory_space<vmem>>, %arg10: memref<1x2xf32, #tpu.memory_space<vmem>>, %arg11: memref<1x1x11xf32, #tpu.memory_space<smem>>) attributes {dimension_semantics = [#tpu.dimension_semantics<parallel>], iteration_bounds = array<i64: 3>, scalar_prefetch = 0 : i64, scratch_operands = 0 : i64, tpu.core_type = #tpu.core_type<tc>, window_params = [{transform_indices = @transform_0, window_bounds = array<i64: 1, 16, 11>}, {transform_indices = @transform_1, window_bounds = array<i64: 1, 16, 4>}, {transform_indices = @transform_2, window_bounds = array<i64: 1, 16, 11>}, {transform_indices = @transform_3, window_bounds = array<i64: 1, 16, 4>}, {transform_indices = @transform_4, window_bounds = array<i64: 1, 16, 11>}, {transform_indices = @transform_5, window_bounds = array<i64: 1, 16, 4>}, {transform_indices = @transform_6, window_bounds = array<i64: 1, 16, 21>}, {transform_indices = @transform_7, window_bounds = array<i64: 1, 16, 6>}, {transform_indices = @transform_8, window_bounds = array<i64: 1, 8, 14>}, {pipeline_mode = #tpu.pipeline_mode<synchronous>, transform_indices = @transform_9, window_bounds = array<i64: 1, 2>}, {transform_indices = @transform_10, window_bounds = array<i64: 1, 1, 11>}]} {
    %c0 = arith.constant 0 : index
    %c0_0 = arith.constant 0 : index
    %c0_1 = arith.constant 0 : index
    %0 = vector.load %arg2[%c0, %c0_0, %c0_1] : memref<1x16x4xf32, #tpu.memory_space<vmem>>, vector<1x16x4xf32>
    %1 = vector.shape_cast %0 : vector<1x16x4xf32> to vector<16x4xf32>
    %c0_2 = arith.constant 0 : index
    %c0_3 = arith.constant 0 : index
    %c0_4 = arith.constant 0 : index
    %2 = vector.load %arg1[%c0_2, %c0_3, %c0_4] : memref<1x16x11xf32, #tpu.memory_space<vmem>>, vector<1x16x11xf32>
    %3 = vector.shape_cast %2 : vector<1x16x11xf32> to vector<16x11xf32>
    %4 = vector.extract_strided_slice %1 {offsets = [0, 0], sizes = [16, 1], strides = [1, 1]} : vector<16x4xf32> to vector<16x1xf32>
    %5 = vector.extract_strided_slice %1 {offsets = [0, 0], sizes = [16, 1], strides = [1, 1]} : vector<16x4xf32> to vector<16x1xf32>
    %6 = arith.fptosi %5 : vector<16x1xf32> to vector<16x1xi32>
    %7 = vector.extract_strided_slice %1 {offsets = [0, 1], sizes = [16, 1], strides = [1, 1]} : vector<16x4xf32> to vector<16x1xf32>
    %8 = vector.extract_strided_slice %1 {offsets = [0, 2], sizes = [16, 1], strides = [1, 1]} : vector<16x4xf32> to vector<16x1xf32>
    %9 = vector.extract_strided_slice %1 {offsets = [0, 3], sizes = [16, 1], strides = [1, 1]} : vector<16x4xf32> to vector<16x1xf32>
    %10 = tpu.iota {dimensions = array<i32: 1>} : vector<16x11xi32>
    %11 = vector.broadcast %6 : vector<16x1xi32> to vector<16x11xi32>
    %12 = arith.cmpi eq, %10, %11 : vector<16x11xi32>
    %13 = arith.extui %12 : vector<16x11xi1> to vector<16x11xi32>
    %14 = arith.sitofp %13 : vector<16x11xi32> to vector<16x11xf32>
    %cst = arith.constant dense<0xFF800000> : vector<16xf32>
    %15 = vector.multi_reduction <maximumf>, %3, %cst [1] : vector<16x11xf32> to vector<16xf32>
    %16 = vector.shape_cast %15 : vector<16xf32> to vector<16x1xf32>
    %17 = vector.broadcast %16 : vector<16x1xf32> to vector<16x11xf32>
    %18 = arith.subf %3, %17 : vector<16x11xf32>
    %19 = math.exp %18 : vector<16x11xf32>
    %cst_5 = arith.constant dense<0.000000e+00> : vector<16xf32>
    %20 = vector.multi_reduction <add>, %19, %cst_5 [1] : vector<16x11xf32> to vector<16xf32>
    %21 = vector.shape_cast %20 : vector<16xf32> to vector<16x1xf32>
    %22 = math.log %21 : vector<16x1xf32>
    %23 = arith.addf %22, %16 : vector<16x1xf32>
    %24 = arith.mulf %3, %14 : vector<16x11xf32>
    %cst_6 = arith.constant dense<0.000000e+00> : vector<16xf32>
    %25 = vector.multi_reduction <add>, %24, %cst_6 [1] : vector<16x11xf32> to vector<16xf32>
    %26 = vector.shape_cast %25 : vector<16xf32> to vector<16x1xf32>
    %27 = arith.subf %23, %26 : vector<16x1xf32>
    %28 = arith.mulf %8, %7 : vector<16x1xf32>
    %29 = arith.mulf %28, %27 : vector<16x1xf32>
    %30 = vector.shape_cast %29 : vector<16x1xf32> to vector<1x16x1xf32>
    %cst_7 = arith.constant dense<0.000000e+00> : vector<1xf32>
    %31 = vector.multi_reduction <add>, %30, %cst_7 [1, 2] : vector<1x16x1xf32> to vector<1xf32>
    %32 = vector.shape_cast %31 : vector<1xf32> to vector<1x1x1xf32>
    %33 = vector.extract %32[0, 0, 0] : f32 from vector<1x1x1xf32>
    %34 = vector.shape_cast %8 : vector<16x1xf32> to vector<1x16x1xf32>
    %cst_8 = arith.constant dense<0.000000e+00> : vector<1xf32>
    %35 = vector.multi_reduction <add>, %34, %cst_8 [1, 2] : vector<1x16x1xf32> to vector<1xf32>
    %36 = vector.shape_cast %35 : vector<1xf32> to vector<1x1x1xf32>
    %37 = vector.extract %36[0, 0, 0] : f32 from vector<1x1x1xf32>
    %38 = arith.sitofp %10 : vector<16x11xi32> to vector<16x11xf32>
    %39 = vector.broadcast %16 : vector<16x1xf32> to vector<16x11xf32>
    %40 = arith.cmpf oge, %3, %39 : vector<16x11xf32>
    %cst_9 = arith.constant 1.100000e+01 : f32
    %41 = vector.broadcast %cst_9 : f32 to vector<16x11xf32>
    %42 = arith.select %40, %38, %41 : vector<16x11xi1>, vector<16x11xf32>
    %cst_10 = arith.constant dense<0x7F800000> : vector<16xf32>
    %43 = vector.multi_reduction <minimumf>, %42, %cst_10 [1] : vector<16x11xf32> to vector<16xf32>
    %44 = vector.shape_cast %43 : vector<16xf32> to vector<16x1xf32>
    %45 = arith.fptosi %44 : vector<16x1xf32> to vector<16x1xi32>
    %46 = arith.fptosi %4 : vector<16x1xf32> to vector<16x1xi32>
    %47 = arith.cmpi eq, %45, %46 : vector<16x1xi32>
    %48 = arith.extui %47 : vector<16x1xi1> to vector<16x1xi32>
    %49 = arith.sitofp %48 : vector<16x1xi32> to vector<16x1xf32>
    %50 = arith.mulf %49, %9 : vector<16x1xf32>
    %51 = vector.shape_cast %50 : vector<16x1xf32> to vector<1x16x1xf32>
    %cst_11 = arith.constant dense<0.000000e+00> : vector<1xf32>
    %52 = vector.multi_reduction <add>, %51, %cst_11 [1, 2] : vector<1x16x1xf32> to vector<1xf32>
    %53 = vector.shape_cast %52 : vector<1xf32> to vector<1x1x1xf32>
    %54 = vector.extract %53[0, 0, 0] : f32 from vector<1x1x1xf32>
    %c0_12 = arith.constant 0 : index
    %c0_13 = arith.constant 0 : index
    %c0_14 = arith.constant 0 : index
    %55 = vector.load %arg4[%c0_12, %c0_13, %c0_14] : memref<1x16x4xf32, #tpu.memory_space<vmem>>, vector<1x16x4xf32>
    %56 = vector.shape_cast %55 : vector<1x16x4xf32> to vector<16x4xf32>
    %c0_15 = arith.constant 0 : index
    %c0_16 = arith.constant 0 : index
    %c0_17 = arith.constant 0 : index
    %57 = vector.load %arg3[%c0_15, %c0_16, %c0_17] : memref<1x16x11xf32, #tpu.memory_space<vmem>>, vector<1x16x11xf32>
    %58 = vector.shape_cast %57 : vector<1x16x11xf32> to vector<16x11xf32>
    %59 = vector.extract_strided_slice %56 {offsets = [0, 0], sizes = [16, 1], strides = [1, 1]} : vector<16x4xf32> to vector<16x1xf32>
    %60 = vector.extract_strided_slice %56 {offsets = [0, 0], sizes = [16, 1], strides = [1, 1]} : vector<16x4xf32> to vector<16x1xf32>
    %61 = arith.fptosi %60 : vector<16x1xf32> to vector<16x1xi32>
    %62 = vector.extract_strided_slice %56 {offsets = [0, 1], sizes = [16, 1], strides = [1, 1]} : vector<16x4xf32> to vector<16x1xf32>
    %63 = vector.extract_strided_slice %56 {offsets = [0, 2], sizes = [16, 1], strides = [1, 1]} : vector<16x4xf32> to vector<16x1xf32>
    %64 = vector.extract_strided_slice %56 {offsets = [0, 3], sizes = [16, 1], strides = [1, 1]} : vector<16x4xf32> to vector<16x1xf32>
    %65 = tpu.iota {dimensions = array<i32: 1>} : vector<16x11xi32>
    %66 = vector.broadcast %61 : vector<16x1xi32> to vector<16x11xi32>
    %67 = arith.cmpi eq, %65, %66 : vector<16x11xi32>
    %68 = arith.extui %67 : vector<16x11xi1> to vector<16x11xi32>
    %69 = arith.sitofp %68 : vector<16x11xi32> to vector<16x11xf32>
    %cst_18 = arith.constant dense<0xFF800000> : vector<16xf32>
    %70 = vector.multi_reduction <maximumf>, %58, %cst_18 [1] : vector<16x11xf32> to vector<16xf32>
    %71 = vector.shape_cast %70 : vector<16xf32> to vector<16x1xf32>
    %72 = vector.broadcast %71 : vector<16x1xf32> to vector<16x11xf32>
    %73 = arith.subf %58, %72 : vector<16x11xf32>
    %74 = math.exp %73 : vector<16x11xf32>
    %cst_19 = arith.constant dense<0.000000e+00> : vector<16xf32>
    %75 = vector.multi_reduction <add>, %74, %cst_19 [1] : vector<16x11xf32> to vector<16xf32>
    %76 = vector.shape_cast %75 : vector<16xf32> to vector<16x1xf32>
    %77 = math.log %76 : vector<16x1xf32>
    %78 = arith.addf %77, %71 : vector<16x1xf32>
    %79 = arith.mulf %58, %69 : vector<16x11xf32>
    %cst_20 = arith.constant dense<0.000000e+00> : vector<16xf32>
    %80 = vector.multi_reduction <add>, %79, %cst_20 [1] : vector<16x11xf32> to vector<16xf32>
    %81 = vector.shape_cast %80 : vector<16xf32> to vector<16x1xf32>
    %82 = arith.subf %78, %81 : vector<16x1xf32>
    %83 = arith.mulf %63, %62 : vector<16x1xf32>
    %84 = arith.mulf %83, %82 : vector<16x1xf32>
    %85 = vector.shape_cast %84 : vector<16x1xf32> to vector<1x16x1xf32>
    %cst_21 = arith.constant dense<0.000000e+00> : vector<1xf32>
    %86 = vector.multi_reduction <add>, %85, %cst_21 [1, 2] : vector<1x16x1xf32> to vector<1xf32>
    %87 = vector.shape_cast %86 : vector<1xf32> to vector<1x1x1xf32>
    %88 = vector.extract %87[0, 0, 0] : f32 from vector<1x1x1xf32>
    %89 = vector.shape_cast %63 : vector<16x1xf32> to vector<1x16x1xf32>
    %cst_22 = arith.constant dense<0.000000e+00> : vector<1xf32>
    %90 = vector.multi_reduction <add>, %89, %cst_22 [1, 2] : vector<1x16x1xf32> to vector<1xf32>
    %91 = vector.shape_cast %90 : vector<1xf32> to vector<1x1x1xf32>
    %92 = vector.extract %91[0, 0, 0] : f32 from vector<1x1x1xf32>
    %93 = arith.sitofp %65 : vector<16x11xi32> to vector<16x11xf32>
    %94 = vector.broadcast %71 : vector<16x1xf32> to vector<16x11xf32>
    %95 = arith.cmpf oge, %58, %94 : vector<16x11xf32>
    %cst_23 = arith.constant 1.100000e+01 : f32
    %96 = vector.broadcast %cst_23 : f32 to vector<16x11xf32>
    %97 = arith.select %95, %93, %96 : vector<16x11xi1>, vector<16x11xf32>
    %cst_24 = arith.constant dense<0x7F800000> : vector<16xf32>
    %98 = vector.multi_reduction <minimumf>, %97, %cst_24 [1] : vector<16x11xf32> to vector<16xf32>
    %99 = vector.shape_cast %98 : vector<16xf32> to vector<16x1xf32>
    %100 = arith.fptosi %99 : vector<16x1xf32> to vector<16x1xi32>
    %101 = arith.fptosi %59 : vector<16x1xf32> to vector<16x1xi32>
    %102 = arith.cmpi eq, %100, %101 : vector<16x1xi32>
    %103 = arith.extui %102 : vector<16x1xi1> to vector<16x1xi32>
    %104 = arith.sitofp %103 : vector<16x1xi32> to vector<16x1xf32>
    %105 = arith.mulf %104, %64 : vector<16x1xf32>
    %106 = vector.shape_cast %105 : vector<16x1xf32> to vector<1x16x1xf32>
    %cst_25 = arith.constant dense<0.000000e+00> : vector<1xf32>
    %107 = vector.multi_reduction <add>, %106, %cst_25 [1, 2] : vector<1x16x1xf32> to vector<1xf32>
    %108 = vector.shape_cast %107 : vector<1xf32> to vector<1x1x1xf32>
    %109 = vector.extract %108[0, 0, 0] : f32 from vector<1x1x1xf32>
    %c0_26 = arith.constant 0 : index
    %c0_27 = arith.constant 0 : index
    %c0_28 = arith.constant 0 : index
    %110 = vector.load %arg6[%c0_26, %c0_27, %c0_28] : memref<1x16x4xf32, #tpu.memory_space<vmem>>, vector<1x16x4xf32>
    %111 = vector.shape_cast %110 : vector<1x16x4xf32> to vector<16x4xf32>
    %c0_29 = arith.constant 0 : index
    %c0_30 = arith.constant 0 : index
    %c0_31 = arith.constant 0 : index
    %112 = vector.load %arg5[%c0_29, %c0_30, %c0_31] : memref<1x16x11xf32, #tpu.memory_space<vmem>>, vector<1x16x11xf32>
    %113 = vector.shape_cast %112 : vector<1x16x11xf32> to vector<16x11xf32>
    %114 = vector.extract_strided_slice %111 {offsets = [0, 0], sizes = [16, 1], strides = [1, 1]} : vector<16x4xf32> to vector<16x1xf32>
    %115 = vector.extract_strided_slice %111 {offsets = [0, 0], sizes = [16, 1], strides = [1, 1]} : vector<16x4xf32> to vector<16x1xf32>
    %116 = arith.fptosi %115 : vector<16x1xf32> to vector<16x1xi32>
    %117 = vector.extract_strided_slice %111 {offsets = [0, 1], sizes = [16, 1], strides = [1, 1]} : vector<16x4xf32> to vector<16x1xf32>
    %118 = vector.extract_strided_slice %111 {offsets = [0, 2], sizes = [16, 1], strides = [1, 1]} : vector<16x4xf32> to vector<16x1xf32>
    %119 = vector.extract_strided_slice %111 {offsets = [0, 3], sizes = [16, 1], strides = [1, 1]} : vector<16x4xf32> to vector<16x1xf32>
    %120 = tpu.iota {dimensions = array<i32: 1>} : vector<16x11xi32>
    %121 = vector.broadcast %116 : vector<16x1xi32> to vector<16x11xi32>
    %122 = arith.cmpi eq, %120, %121 : vector<16x11xi32>
    %123 = arith.extui %122 : vector<16x11xi1> to vector<16x11xi32>
    %124 = arith.sitofp %123 : vector<16x11xi32> to vector<16x11xf32>
    %cst_32 = arith.constant dense<0xFF800000> : vector<16xf32>
    %125 = vector.multi_reduction <maximumf>, %113, %cst_32 [1] : vector<16x11xf32> to vector<16xf32>
    %126 = vector.shape_cast %125 : vector<16xf32> to vector<16x1xf32>
    %127 = vector.broadcast %126 : vector<16x1xf32> to vector<16x11xf32>
    %128 = arith.subf %113, %127 : vector<16x11xf32>
    %129 = math.exp %128 : vector<16x11xf32>
    %cst_33 = arith.constant dense<0.000000e+00> : vector<16xf32>
    %130 = vector.multi_reduction <add>, %129, %cst_33 [1] : vector<16x11xf32> to vector<16xf32>
    %131 = vector.shape_cast %130 : vector<16xf32> to vector<16x1xf32>
    %132 = math.log %131 : vector<16x1xf32>
    %133 = arith.addf %132, %126 : vector<16x1xf32>
    %134 = arith.mulf %113, %124 : vector<16x11xf32>
    %cst_34 = arith.constant dense<0.000000e+00> : vector<16xf32>
    %135 = vector.multi_reduction <add>, %134, %cst_34 [1] : vector<16x11xf32> to vector<16xf32>
    %136 = vector.shape_cast %135 : vector<16xf32> to vector<16x1xf32>
    %137 = arith.subf %133, %136 : vector<16x1xf32>
    %138 = arith.mulf %118, %117 : vector<16x1xf32>
    %139 = arith.mulf %138, %137 : vector<16x1xf32>
    %140 = vector.shape_cast %139 : vector<16x1xf32> to vector<1x16x1xf32>
    %cst_35 = arith.constant dense<0.000000e+00> : vector<1xf32>
    %141 = vector.multi_reduction <add>, %140, %cst_35 [1, 2] : vector<1x16x1xf32> to vector<1xf32>
    %142 = vector.shape_cast %141 : vector<1xf32> to vector<1x1x1xf32>
    %143 = vector.extract %142[0, 0, 0] : f32 from vector<1x1x1xf32>
    %144 = vector.shape_cast %118 : vector<16x1xf32> to vector<1x16x1xf32>
    %cst_36 = arith.constant dense<0.000000e+00> : vector<1xf32>
    %145 = vector.multi_reduction <add>, %144, %cst_36 [1, 2] : vector<1x16x1xf32> to vector<1xf32>
    %146 = vector.shape_cast %145 : vector<1xf32> to vector<1x1x1xf32>
    %147 = vector.extract %146[0, 0, 0] : f32 from vector<1x1x1xf32>
    %148 = arith.sitofp %120 : vector<16x11xi32> to vector<16x11xf32>
    %149 = vector.broadcast %126 : vector<16x1xf32> to vector<16x11xf32>
    %150 = arith.cmpf oge, %113, %149 : vector<16x11xf32>
    %cst_37 = arith.constant 1.100000e+01 : f32
    %151 = vector.broadcast %cst_37 : f32 to vector<16x11xf32>
    %152 = arith.select %150, %148, %151 : vector<16x11xi1>, vector<16x11xf32>
    %cst_38 = arith.constant dense<0x7F800000> : vector<16xf32>
    %153 = vector.multi_reduction <minimumf>, %152, %cst_38 [1] : vector<16x11xf32> to vector<16xf32>
    %154 = vector.shape_cast %153 : vector<16xf32> to vector<16x1xf32>
    %155 = arith.fptosi %154 : vector<16x1xf32> to vector<16x1xi32>
    %156 = arith.fptosi %114 : vector<16x1xf32> to vector<16x1xi32>
    %157 = arith.cmpi eq, %155, %156 : vector<16x1xi32>
    %158 = arith.extui %157 : vector<16x1xi1> to vector<16x1xi32>
    %159 = arith.sitofp %158 : vector<16x1xi32> to vector<16x1xf32>
    %160 = arith.mulf %159, %119 : vector<16x1xf32>
    %161 = vector.shape_cast %160 : vector<16x1xf32> to vector<1x16x1xf32>
    %cst_39 = arith.constant dense<0.000000e+00> : vector<1xf32>
    %162 = vector.multi_reduction <add>, %161, %cst_39 [1, 2] : vector<1x16x1xf32> to vector<1xf32>
    %163 = vector.shape_cast %162 : vector<1xf32> to vector<1x1x1xf32>
    %164 = vector.extract %163[0, 0, 0] : f32 from vector<1x1x1xf32>
    %c0_40 = arith.constant 0 : index
    %c0_41 = arith.constant 0 : index
    %c0_42 = arith.constant 0 : index
    %165 = vector.load %arg8[%c0_40, %c0_41, %c0_42] : memref<1x16x6xf32, #tpu.memory_space<vmem>>, vector<1x16x6xf32>
    %166 = vector.shape_cast %165 : vector<1x16x6xf32> to vector<16x6xf32>
    %c0_43 = arith.constant 0 : index
    %c0_44 = arith.constant 0 : index
    %c0_45 = arith.constant 0 : index
    %167 = vector.load %arg7[%c0_43, %c0_44, %c0_45] : memref<1x16x21xf32, #tpu.memory_space<vmem>>, vector<1x16x21xf32>
    %168 = vector.shape_cast %167 : vector<1x16x21xf32> to vector<16x21xf32>
    %169 = vector.extract_strided_slice %166 {offsets = [0, 0], sizes = [16, 4], strides = [1, 1]} : vector<16x6xf32> to vector<16x4xf32>
    %170 = vector.extract_strided_slice %166 {offsets = [0, 4], sizes = [16, 1], strides = [1, 1]} : vector<16x6xf32> to vector<16x1xf32>
    %171 = vector.extract_strided_slice %169 {offsets = [0, 0], sizes = [16, 1], strides = [1, 1]} : vector<16x4xf32> to vector<16x1xf32>
    %172 = arith.fptosi %171 : vector<16x1xf32> to vector<16x1xi32>
    %173 = vector.extract_strided_slice %169 {offsets = [0, 1], sizes = [16, 1], strides = [1, 1]} : vector<16x4xf32> to vector<16x1xf32>
    %174 = vector.extract_strided_slice %169 {offsets = [0, 2], sizes = [16, 1], strides = [1, 1]} : vector<16x4xf32> to vector<16x1xf32>
    %175 = vector.extract_strided_slice %169 {offsets = [0, 3], sizes = [16, 1], strides = [1, 1]} : vector<16x4xf32> to vector<16x1xf32>
    %176 = tpu.iota {dimensions = array<i32: 1>} : vector<16x21xi32>
    %177 = vector.broadcast %172 : vector<16x1xi32> to vector<16x21xi32>
    %178 = arith.cmpi eq, %176, %177 : vector<16x21xi32>
    %179 = arith.extui %178 : vector<16x21xi1> to vector<16x21xi32>
    %180 = arith.sitofp %179 : vector<16x21xi32> to vector<16x21xf32>
    %cst_46 = arith.constant dense<0xFF800000> : vector<16xf32>
    %181 = vector.multi_reduction <maximumf>, %168, %cst_46 [1] : vector<16x21xf32> to vector<16xf32>
    %182 = vector.shape_cast %181 : vector<16xf32> to vector<16x1xf32>
    %183 = vector.broadcast %182 : vector<16x1xf32> to vector<16x21xf32>
    %184 = arith.subf %168, %183 : vector<16x21xf32>
    %185 = math.exp %184 : vector<16x21xf32>
    %cst_47 = arith.constant dense<0.000000e+00> : vector<16xf32>
    %186 = vector.multi_reduction <add>, %185, %cst_47 [1] : vector<16x21xf32> to vector<16xf32>
    %187 = vector.shape_cast %186 : vector<16xf32> to vector<16x1xf32>
    %188 = math.log %187 : vector<16x1xf32>
    %189 = arith.addf %188, %182 : vector<16x1xf32>
    %190 = arith.mulf %168, %180 : vector<16x21xf32>
    %cst_48 = arith.constant dense<0.000000e+00> : vector<16xf32>
    %191 = vector.multi_reduction <add>, %190, %cst_48 [1] : vector<16x21xf32> to vector<16xf32>
    %192 = vector.shape_cast %191 : vector<16xf32> to vector<16x1xf32>
    %193 = arith.subf %189, %192 : vector<16x1xf32>
    %194 = arith.mulf %174, %173 : vector<16x1xf32>
    %195 = arith.mulf %194, %193 : vector<16x1xf32>
    %196 = vector.shape_cast %195 : vector<16x1xf32> to vector<1x16x1xf32>
    %cst_49 = arith.constant dense<0.000000e+00> : vector<1xf32>
    %197 = vector.multi_reduction <add>, %196, %cst_49 [1, 2] : vector<1x16x1xf32> to vector<1xf32>
    %198 = vector.shape_cast %197 : vector<1xf32> to vector<1x1x1xf32>
    %199 = vector.extract %198[0, 0, 0] : f32 from vector<1x1x1xf32>
    %200 = vector.shape_cast %174 : vector<16x1xf32> to vector<1x16x1xf32>
    %cst_50 = arith.constant dense<0.000000e+00> : vector<1xf32>
    %201 = vector.multi_reduction <add>, %200, %cst_50 [1, 2] : vector<1x16x1xf32> to vector<1xf32>
    %202 = vector.shape_cast %201 : vector<1xf32> to vector<1x1x1xf32>
    %203 = vector.extract %202[0, 0, 0] : f32 from vector<1x1x1xf32>
    %204 = arith.sitofp %176 : vector<16x21xi32> to vector<16x21xf32>
    %205 = vector.broadcast %182 : vector<16x1xf32> to vector<16x21xf32>
    %206 = arith.cmpf oge, %168, %205 : vector<16x21xf32>
    %cst_51 = arith.constant 2.100000e+01 : f32
    %207 = vector.broadcast %cst_51 : f32 to vector<16x21xf32>
    %208 = arith.select %206, %204, %207 : vector<16x21xi1>, vector<16x21xf32>
    %cst_52 = arith.constant dense<0x7F800000> : vector<16xf32>
    %209 = vector.multi_reduction <minimumf>, %208, %cst_52 [1] : vector<16x21xf32> to vector<16xf32>
    %210 = vector.shape_cast %209 : vector<16xf32> to vector<16x1xf32>
    %211 = arith.fptosi %210 : vector<16x1xf32> to vector<16x1xi32>
    %212 = arith.fptosi %170 : vector<16x1xf32> to vector<16x1xi32>
    %213 = arith.cmpi eq, %211, %212 : vector<16x1xi32>
    %214 = arith.extui %213 : vector<16x1xi1> to vector<16x1xi32>
    %215 = arith.sitofp %214 : vector<16x1xi32> to vector<16x1xf32>
    %216 = arith.mulf %215, %175 : vector<16x1xf32>
    %217 = vector.shape_cast %216 : vector<16x1xf32> to vector<1x16x1xf32>
    %cst_53 = arith.constant dense<0.000000e+00> : vector<1xf32>
    %218 = vector.multi_reduction <add>, %217, %cst_53 [1, 2] : vector<1x16x1xf32> to vector<1xf32>
    %219 = vector.shape_cast %218 : vector<1xf32> to vector<1x1x1xf32>
    %220 = vector.extract %219[0, 0, 0] : f32 from vector<1x1x1xf32>
    %c0_54 = arith.constant 0 : index
    %c0_55 = arith.constant 0 : index
    %221 = vector.load %arg10[%c0_54, %c0_55] : memref<1x2xf32, #tpu.memory_space<vmem>>, vector<1x2xf32>
    %222 = vector.extract_strided_slice %166 {offsets = [0, 5], sizes = [16, 1], strides = [1, 1]} : vector<16x6xf32> to vector<16x1xf32>
    %223 = arith.fptosi %222 : vector<16x1xf32> to vector<16x1xi32>
    %c20_i32 = arith.constant 20 : i32
    %224 = vector.broadcast %c20_i32 : i32 to vector<16x1xi32>
    %225 = arith.cmpi ne, %211, %224 : vector<16x1xi32>
    %226 = arith.extui %225 : vector<16x1xi1> to vector<16x1xi32>
    %227 = arith.sitofp %226 : vector<16x1xi32> to vector<16x1xf32>
    %228 = tpu.iota {dimensions = array<i32: 1>} : vector<16x2xi32>
    %229 = vector.broadcast %223 : vector<16x1xi32> to vector<16x2xi32>
    %230 = arith.cmpi eq, %229, %228 : vector<16x2xi32>
    %231 = arith.extui %230 : vector<16x2xi1> to vector<16x2xi32>
    %232 = arith.sitofp %231 : vector<16x2xi32> to vector<16x2xf32>
    %233 = vector.broadcast %227 : vector<16x1xf32> to vector<16x2xf32>
    %234 = arith.mulf %233, %232 : vector<16x2xf32>
    %cst_56 = arith.constant dense<0.000000e+00> : vector<2xf32>
    %235 = vector.multi_reduction <add>, %234, %cst_56 [0] : vector<16x2xf32> to vector<2xf32>
    %236 = vector.shape_cast %235 : vector<2xf32> to vector<1x2xf32>
    %237 = arith.subf %236, %221 : vector<1x2xf32>
    %238 = math.absf %237 : vector<1x2xf32>
    %239 = vector.shape_cast %238 : vector<1x2xf32> to vector<1x1x2xf32>
    %cst_57 = arith.constant dense<0.000000e+00> : vector<1xf32>
    %240 = vector.multi_reduction <add>, %239, %cst_57 [1, 2] : vector<1x1x2xf32> to vector<1xf32>
    %241 = vector.shape_cast %240 : vector<1xf32> to vector<1x1x1xf32>
    %242 = vector.extract %241[0, 0, 0] : f32 from vector<1x1x1xf32>
    %c0_58 = arith.constant 0 : index
    %c0_59 = arith.constant 0 : index
    %c0_60 = arith.constant 0 : index
    %243 = vector.load %arg9[%c0_58, %c0_59, %c0_60] : memref<1x8x14xf32, #tpu.memory_space<vmem>>, vector<1x8x14xf32>
    %244 = vector.shape_cast %243 : vector<1x8x14xf32> to vector<8x14xf32>
    %245 = vector.extract_strided_slice %244 {offsets = [0, 0], sizes = [4, 14], strides = [1, 1]} : vector<8x14xf32> to vector<4x14xf32>
    %246 = vector.extract_strided_slice %244 {offsets = [4, 0], sizes = [4, 14], strides = [1, 1]} : vector<8x14xf32> to vector<4x14xf32>
    %247 = arith.subf %245, %246 : vector<4x14xf32>
    %248 = math.absf %247 : vector<4x14xf32>
    %249 = vector.shape_cast %248 : vector<4x14xf32> to vector<1x4x14xf32>
    %cst_61 = arith.constant dense<0.000000e+00> : vector<1xf32>
    %250 = vector.multi_reduction <add>, %249, %cst_61 [1, 2] : vector<1x4x14xf32> to vector<1xf32>
    %251 = vector.shape_cast %250 : vector<1xf32> to vector<1x1x1xf32>
    %252 = vector.extract %251[0, 0, 0] : f32 from vector<1x1x1xf32>
    %253 = vector.extract_strided_slice %245 {offsets = [0, 0], sizes = [1, 14], strides = [1, 1]} : vector<4x14xf32> to vector<1x14xf32>
    %254 = vector.extract_strided_slice %245 {offsets = [1, 0], sizes = [1, 14], strides = [1, 1]} : vector<4x14xf32> to vector<1x14xf32>
    %255 = vector.extract_strided_slice %245 {offsets = [2, 0], sizes = [1, 14], strides = [1, 1]} : vector<4x14xf32> to vector<1x14xf32>
    %256 = vector.extract_strided_slice %245 {offsets = [3, 0], sizes = [1, 14], strides = [1, 1]} : vector<4x14xf32> to vector<1x14xf32>
    %cst_62 = arith.constant 5.000000e-01 : f32
    %257 = vector.broadcast %cst_62 : f32 to vector<1x14xf32>
    %258 = arith.mulf %257, %255 : vector<1x14xf32>
    %259 = arith.subf %253, %258 : vector<1x14xf32>
    %cst_63 = arith.constant 5.000000e-01 : f32
    %260 = vector.broadcast %cst_63 : f32 to vector<1x14xf32>
    %261 = arith.mulf %260, %256 : vector<1x14xf32>
    %262 = arith.subf %254, %261 : vector<1x14xf32>
    %cst_64 = arith.constant 5.000000e-01 : f32
    %263 = vector.broadcast %cst_64 : f32 to vector<1x14xf32>
    %264 = arith.mulf %263, %255 : vector<1x14xf32>
    %265 = arith.addf %253, %264 : vector<1x14xf32>
    %cst_65 = arith.constant 5.000000e-01 : f32
    %266 = vector.broadcast %cst_65 : f32 to vector<1x14xf32>
    %267 = arith.mulf %266, %256 : vector<1x14xf32>
    %268 = arith.addf %254, %267 : vector<1x14xf32>
    %269 = vector.extract_strided_slice %246 {offsets = [0, 0], sizes = [1, 14], strides = [1, 1]} : vector<4x14xf32> to vector<1x14xf32>
    %270 = vector.extract_strided_slice %246 {offsets = [1, 0], sizes = [1, 14], strides = [1, 1]} : vector<4x14xf32> to vector<1x14xf32>
    %271 = vector.extract_strided_slice %246 {offsets = [2, 0], sizes = [1, 14], strides = [1, 1]} : vector<4x14xf32> to vector<1x14xf32>
    %272 = vector.extract_strided_slice %246 {offsets = [3, 0], sizes = [1, 14], strides = [1, 1]} : vector<4x14xf32> to vector<1x14xf32>
    %cst_66 = arith.constant 5.000000e-01 : f32
    %273 = vector.broadcast %cst_66 : f32 to vector<1x14xf32>
    %274 = arith.mulf %273, %271 : vector<1x14xf32>
    %275 = arith.subf %269, %274 : vector<1x14xf32>
    %cst_67 = arith.constant 5.000000e-01 : f32
    %276 = vector.broadcast %cst_67 : f32 to vector<1x14xf32>
    %277 = arith.mulf %276, %272 : vector<1x14xf32>
    %278 = arith.subf %270, %277 : vector<1x14xf32>
    %cst_68 = arith.constant 5.000000e-01 : f32
    %279 = vector.broadcast %cst_68 : f32 to vector<1x14xf32>
    %280 = arith.mulf %279, %271 : vector<1x14xf32>
    %281 = arith.addf %269, %280 : vector<1x14xf32>
    %cst_69 = arith.constant 5.000000e-01 : f32
    %282 = vector.broadcast %cst_69 : f32 to vector<1x14xf32>
    %283 = arith.mulf %282, %272 : vector<1x14xf32>
    %284 = arith.addf %270, %283 : vector<1x14xf32>
    %285 = arith.subf %265, %259 : vector<1x14xf32>
    %286 = arith.subf %268, %262 : vector<1x14xf32>
    %287 = arith.mulf %285, %286 : vector<1x14xf32>
    %288 = arith.subf %281, %275 : vector<1x14xf32>
    %289 = arith.subf %284, %278 : vector<1x14xf32>
    %290 = arith.mulf %288, %289 : vector<1x14xf32>
    %291 = arith.minimumf %265, %281 : vector<1x14xf32>
    %292 = arith.maximumf %259, %275 : vector<1x14xf32>
    %293 = arith.subf %291, %292 : vector<1x14xf32>
    %cst_70 = arith.constant 0.000000e+00 : f32
    %294 = vector.broadcast %cst_70 : f32 to vector<1x14xf32>
    %295 = arith.maximumf %293, %294 : vector<1x14xf32>
    %296 = arith.minimumf %268, %284 : vector<1x14xf32>
    %297 = arith.maximumf %262, %278 : vector<1x14xf32>
    %298 = arith.subf %296, %297 : vector<1x14xf32>
    %cst_71 = arith.constant 0.000000e+00 : f32
    %299 = vector.broadcast %cst_71 : f32 to vector<1x14xf32>
    %300 = arith.maximumf %298, %299 : vector<1x14xf32>
    %301 = arith.mulf %295, %300 : vector<1x14xf32>
    %302 = arith.addf %287, %290 : vector<1x14xf32>
    %303 = arith.subf %302, %301 : vector<1x14xf32>
    %304 = arith.divf %301, %303 : vector<1x14xf32>
    %305 = arith.maximumf %265, %281 : vector<1x14xf32>
    %306 = arith.minimumf %259, %275 : vector<1x14xf32>
    %307 = arith.subf %305, %306 : vector<1x14xf32>
    %308 = arith.maximumf %268, %284 : vector<1x14xf32>
    %309 = arith.minimumf %262, %278 : vector<1x14xf32>
    %310 = arith.subf %308, %309 : vector<1x14xf32>
    %311 = arith.mulf %307, %310 : vector<1x14xf32>
    %312 = arith.subf %311, %303 : vector<1x14xf32>
    %313 = arith.divf %312, %311 : vector<1x14xf32>
    %314 = arith.subf %304, %313 : vector<1x14xf32>
    %cst_72 = arith.constant 1.000000e+00 : f32
    %315 = vector.broadcast %cst_72 : f32 to vector<1x14xf32>
    %316 = arith.subf %315, %314 : vector<1x14xf32>
    %317 = vector.shape_cast %316 : vector<1x14xf32> to vector<1x1x14xf32>
    %cst_73 = arith.constant dense<0.000000e+00> : vector<1xf32>
    %318 = vector.multi_reduction <add>, %317, %cst_73 [1, 2] : vector<1x1x14xf32> to vector<1xf32>
    %319 = vector.shape_cast %318 : vector<1xf32> to vector<1x1x1xf32>
    %320 = vector.extract %319[0, 0, 0] : f32 from vector<1x1x1xf32>
    %321 = arith.addf %33, %88 : f32
    %322 = arith.addf %321, %143 : f32
    %c0_74 = arith.constant 0 : index
    %c0_75 = arith.constant 0 : index
    %c0_76 = arith.constant 0 : index
    %323 = memref.load %arg11[%c0_74, %c0_75, %c0_76] : memref<1x1x11xf32, #tpu.memory_space<smem>>
    memref.store %322, %arg11[%c0_74, %c0_75, %c0_76] : memref<1x1x11xf32, #tpu.memory_space<smem>>
    %324 = arith.addf %37, %92 : f32
    %325 = arith.addf %324, %147 : f32
    %c0_77 = arith.constant 0 : index
    %c0_78 = arith.constant 0 : index
    %c1 = arith.constant 1 : index
    %326 = memref.load %arg11[%c0_77, %c0_78, %c1] : memref<1x1x11xf32, #tpu.memory_space<smem>>
    memref.store %325, %arg11[%c0_77, %c0_78, %c1] : memref<1x1x11xf32, #tpu.memory_space<smem>>
    %c0_79 = arith.constant 0 : index
    %c0_80 = arith.constant 0 : index
    %c2 = arith.constant 2 : index
    %327 = memref.load %arg11[%c0_79, %c0_80, %c2] : memref<1x1x11xf32, #tpu.memory_space<smem>>
    memref.store %199, %arg11[%c0_79, %c0_80, %c2] : memref<1x1x11xf32, #tpu.memory_space<smem>>
    %c0_81 = arith.constant 0 : index
    %c0_82 = arith.constant 0 : index
    %c3 = arith.constant 3 : index
    %328 = memref.load %arg11[%c0_81, %c0_82, %c3] : memref<1x1x11xf32, #tpu.memory_space<smem>>
    memref.store %203, %arg11[%c0_81, %c0_82, %c3] : memref<1x1x11xf32, #tpu.memory_space<smem>>
    %c0_83 = arith.constant 0 : index
    %c0_84 = arith.constant 0 : index
    %c4 = arith.constant 4 : index
    %329 = memref.load %arg11[%c0_83, %c0_84, %c4] : memref<1x1x11xf32, #tpu.memory_space<smem>>
    memref.store %242, %arg11[%c0_83, %c0_84, %c4] : memref<1x1x11xf32, #tpu.memory_space<smem>>
    %c0_85 = arith.constant 0 : index
    %c0_86 = arith.constant 0 : index
    %c5 = arith.constant 5 : index
    %330 = memref.load %arg11[%c0_85, %c0_86, %c5] : memref<1x1x11xf32, #tpu.memory_space<smem>>
    memref.store %54, %arg11[%c0_85, %c0_86, %c5] : memref<1x1x11xf32, #tpu.memory_space<smem>>
    %c0_87 = arith.constant 0 : index
    %c0_88 = arith.constant 0 : index
    %c6 = arith.constant 6 : index
    %331 = memref.load %arg11[%c0_87, %c0_88, %c6] : memref<1x1x11xf32, #tpu.memory_space<smem>>
    memref.store %109, %arg11[%c0_87, %c0_88, %c6] : memref<1x1x11xf32, #tpu.memory_space<smem>>
    %c0_89 = arith.constant 0 : index
    %c0_90 = arith.constant 0 : index
    %c7 = arith.constant 7 : index
    %332 = memref.load %arg11[%c0_89, %c0_90, %c7] : memref<1x1x11xf32, #tpu.memory_space<smem>>
    memref.store %164, %arg11[%c0_89, %c0_90, %c7] : memref<1x1x11xf32, #tpu.memory_space<smem>>
    %c0_91 = arith.constant 0 : index
    %c0_92 = arith.constant 0 : index
    %c8 = arith.constant 8 : index
    %333 = memref.load %arg11[%c0_91, %c0_92, %c8] : memref<1x1x11xf32, #tpu.memory_space<smem>>
    memref.store %220, %arg11[%c0_91, %c0_92, %c8] : memref<1x1x11xf32, #tpu.memory_space<smem>>
    %c0_93 = arith.constant 0 : index
    %c0_94 = arith.constant 0 : index
    %c9 = arith.constant 9 : index
    %334 = memref.load %arg11[%c0_93, %c0_94, %c9] : memref<1x1x11xf32, #tpu.memory_space<smem>>
    memref.store %252, %arg11[%c0_93, %c0_94, %c9] : memref<1x1x11xf32, #tpu.memory_space<smem>>
    %c0_95 = arith.constant 0 : index
    %c0_96 = arith.constant 0 : index
    %c10 = arith.constant 10 : index
    %335 = memref.load %arg11[%c0_95, %c0_96, %c10] : memref<1x1x11xf32, #tpu.memory_space<smem>>
    memref.store %320, %arg11[%c0_95, %c0_96, %c10] : memref<1x1x11xf32, #tpu.memory_space<smem>>
    return
  }
  func.func @transform_0(%arg0: i32) -> (i32, i32, i32) {
    %c0_i32 = arith.constant 0 : i32
    %c0_i32_0 = arith.constant 0 : i32
    %c0_i32_1 = arith.constant 0 : i32
    return %arg0, %c0_i32, %c0_i32_0 : i32, i32, i32
  }
  func.func @transform_1(%arg0: i32) -> (i32, i32, i32) {
    %c0_i32 = arith.constant 0 : i32
    %c0_i32_0 = arith.constant 0 : i32
    %c0_i32_1 = arith.constant 0 : i32
    return %arg0, %c0_i32, %c0_i32_0 : i32, i32, i32
  }
  func.func @transform_2(%arg0: i32) -> (i32, i32, i32) {
    %c0_i32 = arith.constant 0 : i32
    %c0_i32_0 = arith.constant 0 : i32
    %c0_i32_1 = arith.constant 0 : i32
    return %arg0, %c0_i32, %c0_i32_0 : i32, i32, i32
  }
  func.func @transform_3(%arg0: i32) -> (i32, i32, i32) {
    %c0_i32 = arith.constant 0 : i32
    %c0_i32_0 = arith.constant 0 : i32
    %c0_i32_1 = arith.constant 0 : i32
    return %arg0, %c0_i32, %c0_i32_0 : i32, i32, i32
  }
  func.func @transform_4(%arg0: i32) -> (i32, i32, i32) {
    %c0_i32 = arith.constant 0 : i32
    %c0_i32_0 = arith.constant 0 : i32
    %c0_i32_1 = arith.constant 0 : i32
    return %arg0, %c0_i32, %c0_i32_0 : i32, i32, i32
  }
  func.func @transform_5(%arg0: i32) -> (i32, i32, i32) {
    %c0_i32 = arith.constant 0 : i32
    %c0_i32_0 = arith.constant 0 : i32
    %c0_i32_1 = arith.constant 0 : i32
    return %arg0, %c0_i32, %c0_i32_0 : i32, i32, i32
  }
  func.func @transform_6(%arg0: i32) -> (i32, i32, i32) {
    %c0_i32 = arith.constant 0 : i32
    %c0_i32_0 = arith.constant 0 : i32
    %c0_i32_1 = arith.constant 0 : i32
    return %arg0, %c0_i32, %c0_i32_0 : i32, i32, i32
  }
  func.func @transform_7(%arg0: i32) -> (i32, i32, i32) {
    %c0_i32 = arith.constant 0 : i32
    %c0_i32_0 = arith.constant 0 : i32
    %c0_i32_1 = arith.constant 0 : i32
    return %arg0, %c0_i32, %c0_i32_0 : i32, i32, i32
  }
  func.func @transform_8(%arg0: i32) -> (i32, i32, i32) {
    %c0_i32 = arith.constant 0 : i32
    %c0_i32_0 = arith.constant 0 : i32
    %c0_i32_1 = arith.constant 0 : i32
    return %arg0, %c0_i32, %c0_i32_0 : i32, i32, i32
  }
  func.func @transform_9(%arg0: i32) -> (i32, i32) {
    %c0_i32 = arith.constant 0 : i32
    %c0_i32_0 = arith.constant 0 : i32
    %c0_i32_1 = arith.constant 0 : i32
    return %c0_i32, %c0_i32_0 : i32, i32
  }
  func.func @transform_10(%arg0: i32) -> (i32, i32, i32) {
    %c0_i32 = arith.constant 0 : i32
    %c0_i32_0 = arith.constant 0 : i32
    %c0_i32_1 = arith.constant 0 : i32
    return %arg0, %c0_i32, %c0_i32_0 : i32, i32, i32
  }
}

</mosaic_0001>

<llo_original>
// kernel: _reltr_fused_losses.1
$region0: #{_reltr_fused_losses.1}
  #allocation0 [shape = 'u32[]', space=smem, size = 0x4, offset = 0x4, fixed_abs, tag = 'smem constant byte address 0x4 - core index']
  #allocation1 [shape = 'u32[144,128]{1,0:T(1,128)}', space=vmem, size = 0x12000, scoped, tag = 'internal scratch']
  %s0 = inlined_call_operand.vmem [shape: f32[3,16,11], index: 0, kind: input, shape index: {}]
  %s1 = inlined_call_operand.vmem [shape: f32[3,16,4], index: 1, kind: input, shape index: {}]
  %s2 = inlined_call_operand.vmem [shape: f32[3,16,11], index: 2, kind: input, shape index: {}]
  %s3 = inlined_call_operand.vmem [shape: f32[3,16,4], index: 3, kind: input, shape index: {}]
  %s4 = inlined_call_operand.vmem [shape: f32[3,16,11], index: 4, kind: input, shape index: {}]
  %s5 = inlined_call_operand.vmem [shape: f32[3,16,4], index: 5, kind: input, shape index: {}]
  %s6 = inlined_call_operand.vmem [shape: f32[3,16,21], index: 6, kind: input, shape index: {}]
  %s7 = inlined_call_operand.vmem [shape: f32[3,16,6], index: 7, kind: input, shape index: {}]
  %s8 = inlined_call_operand.vmem [shape: f32[3,8,14], index: 8, kind: input, shape index: {}]
  %s9 = inlined_call_operand.vmem [shape: f32[1,2], index: 9, kind: input, shape index: {}]
  %s10 = inlined_call_operand.vmem [shape: f32[3,1,11], index: 10, kind: output, shape index: {}]
  %s11 = sld [smem:[#allocation0]]
  $region73: #{_reltr_fused_losses.1} parent=0
    _
  %s13 = ssub.s32 1, %s11
  %s14 = scalar_select 0, %s13, %s11
  $region1: #{_reltr_fused_losses.1} parent=0
    #allocation2 [shape = 'u8[1024]{0}', space=smem, size = 0x400, scoped, tag = 'output window, operand 0']
    #allocation3 [shape = 's32[2]{0}', space=sflag, size = 0x8, scoped, tag = 'scoped memory for _reltr_fused_losses.1']
    %15 = vsyncpa [#allocation3], 0
    %s16 = scalar_lea.sflag [#allocation3], 1
    %17 = vsyncpa %s16, 0
    loop: start=0, step=1, limit=5
    $region2: #{_reltr_fused_losses.1} parent=1 // loop_pre_header
      _
    $region3: #{_reltr_fused_losses.1} parent=1 // loop_header
      %s19 = sphi 0, %s23
      %p20 = scmp.ge.s32.totalorder %s19, 5
      %s29 = sphi 0, %s31
      %s32 = sphi 0, %s29
      %s33 = sphi 0, %s32
      %s49 = sphi 0, %s33
      %s55 = sphi 0, %s57
      %s58 = sphi 0, %s55
      %s59 = sphi 0, %s58
      %s75 = sphi 0, %s59
      %s81 = sphi 0, %s83
      %s84 = sphi 0, %s81
      %s85 = sphi 0, %s84
      %s101 = sphi 0, %s85
      %s107 = sphi 0, %s109
      %s110 = sphi 0, %s107
      %s111 = sphi 0, %s110
      %s127 = sphi 0, %s111
      %s133 = sphi 0, %s135
      %s136 = sphi 0, %s133
      %s137 = sphi 0, %s136
      %s153 = sphi 0, %s137
      %s159 = sphi 0, %s161
      %s162 = sphi 0, %s159
      %s163 = sphi 0, %s162
      %s179 = sphi 0, %s163
      %s185 = sphi 0, %s187
      %s188 = sphi 0, %s185
      %s189 = sphi 0, %s188
      %s205 = sphi 0, %s189
      %s211 = sphi 0, %s213
      %s214 = sphi 0, %s211
      %s215 = sphi 0, %s214
      %s231 = sphi 0, %s215
      %s237 = sphi 0, %s239
      %s240 = sphi 0, %s237
      %s241 = sphi 0, %s240
      %s257 = sphi 0, %s241
      %s261 = sphi 0, %s261
      %s263 = sphi 0, %s261
      %s264 = sphi 0, %s263
      %s278 = sphi 0, %s264
      %s284 = sphi 0, %s286
      %s287 = sphi 0, %s284
      %s288 = sphi 0, %s287
      %s304 = sphi 0, %s288
    $region4: #{_reltr_fused_losses.1} parent=1 // loop_header_branch
      %22 = sbr.rel (%p20) target = $region8
    $region5: #{_reltr_fused_losses.1} parent=1 // loop_body
      %s24 = ssub.s32 %s19, 1
      %s25 = ssub.s32 %s19, 2
      %s26 = sadd.s32 %s19, 1
      %s27 = ssub.s32 %s19, %s26
      %p28 = scmp.eq.s32.totalorder %s27, 0
      %s30 = sadd.s32 %s29, 1
      %s31 = scalar_select %p28, %s29, %s30
      %p34 = pneg %p28
      %p35 = scmp.eq.s32.totalorder %s19, 2
      %p36 = por %p34, %p35
      %p37 = scmp.ne.s32.totalorder %s29, %s32
      %p38 = scmp.eq.s32.totalorder %s19, 0
      %p39 = por %p37, %p38
      %p40 = scmp.ne.s32.totalorder %s29, %s32
      %p41 = scmp.eq.s32.totalorder %s24, 2
      %p42 = por %p40, %p41
      %p43 = scmp.ne.s32.totalorder %s32, %s33
      %p44 = scmp.eq.s32.totalorder %s24, 0
      %p45 = por %p43, %p44
      %p46 = scmp.ne.s32.totalorder %s32, %s33
      %p47 = scmp.eq.s32.totalorder %s25, 2
      %p48 = por %p46, %p47
      %p50 = scmp.ne.s32.totalorder %s33, %s49
      %p51 = scmp.eq.s32.totalorder %s25, 0
      %p52 = por %p50, %p51
      %s53 = ssub.s32 %s19, %s26
      %p54 = scmp.eq.s32.totalorder %s53, 0
      %s56 = sadd.s32 %s55, 1
      %s57 = scalar_select %p54, %s55, %s56
      %p60 = pneg %p54
      %p61 = scmp.eq.s32.totalorder %s19, 2
      %p62 = por %p60, %p61
      %p63 = scmp.ne.s32.totalorder %s55, %s58
      %p64 = scmp.eq.s32.totalorder %s19, 0
      %p65 = por %p63, %p64
      %p66 = scmp.ne.s32.totalorder %s55, %s58
      %p67 = scmp.eq.s32.totalorder %s24, 2
      %p68 = por %p66, %p67
      %p69 = scmp.ne.s32.totalorder %s58, %s59
      %p70 = scmp.eq.s32.totalorder %s24, 0
      %p71 = por %p69, %p70
      %p72 = scmp.ne.s32.totalorder %s58, %s59
      %p73 = scmp.eq.s32.totalorder %s25, 2
      %p74 = por %p72, %p73
      %p76 = scmp.ne.s32.totalorder %s59, %s75
      %p77 = scmp.eq.s32.totalorder %s25, 0
      %p78 = por %p76, %p77
      %s79 = ssub.s32 %s19, %s26
      %p80 = scmp.eq.s32.totalorder %s79, 0
      %s82 = sadd.s32 %s81, 1
      %s83 = scalar_select %p80, %s81, %s82
      %p86 = pneg %p80
      %p87 = scmp.eq.s32.totalorder %s19, 2
      %p88 = por %p86, %p87
      %p89 = scmp.ne.s32.totalorder %s81, %s84
      %p90 = scmp.eq.s32.totalorder %s19, 0
      %p91 = por %p89, %p90
      %p92 = scmp.ne.s32.totalorder %s81, %s84
      %p93 = scmp.eq.s32.totalorder %s24, 2
      %p94 = por %p92, %p93
      %p95 = scmp.ne.s32.totalorder %s84, %s85
      %p96 = scmp.eq.s32.totalorder %s24, 0
      %p97 = por %p95, %p96
      %p98 = scmp.ne.s32.totalorder %s84, %s85
      %p99 = scmp.eq.s32.totalorder %s25, 2
      %p100 = por %p98, %p99
      %p102 = scmp.ne.s32.totalorder %s85, %s101
      %p103 = scmp.eq.s32.totalorder %s25, 0
      %p104 = por %p102, %p103
      %s105 = ssub.s32 %s19, %s26
      %p106 = scmp.eq.s32.totalorder %s105, 0
      %s108 = sadd.s32 %s107, 1
      %s109 = scalar_select %p106, %s107, %s108
      %p112 = pneg %p106
      %p113 = scmp.eq.s32.totalorder %s19, 2
      %p114 = por %p112, %p113
      %p115 = scmp.ne.s32.totalorder %s107, %s110
      %p116 = scmp.eq.s32.totalorder %s19, 0
      %p117 = por %p115, %p116
      %p118 = scmp.ne.s32.totalorder %s107, %s110
      %p119 = scmp.eq.s32.totalorder %s24, 2
      %p120 = por %p118, %p119
      %p121 = scmp.ne.s32.totalorder %s110, %s111
      %p122 = scmp.eq.s32.totalorder %s24, 0
      %p123 = por %p121, %p122
      %p124 = scmp.ne.s32.totalorder %s110, %s111
      %p125 = scmp.eq.s32.totalorder %s25, 2
      %p126 = por %p124, %p125
      %p128 = scmp.ne.s32.totalorder %s111, %s127
      %p129 = scmp.eq.s32.totalorder %s25, 0
      %p130 = por %p128, %p129
      %s131 = ssub.s32 %s19, %s26
      %p132 = scmp.eq.s32.totalorder %s131, 0
      %s134 = sadd.s32 %s133, 1
      %s135 = scalar_select %p132, %s133, %s134
      %p138 = pneg %p132
      %p139 = scmp.eq.s32.totalorder %s19, 2
      %p140 = por %p138, %p139
      %p141 = scmp.ne.s32.totalorder %s133, %s136
      %p142 = scmp.eq.s32.totalorder %s19, 0
      %p143 = por %p141, %p142
      %p144 = scmp.ne.s32.totalorder %s133, %s136
      %p145 = scmp.eq.s32.totalorder %s24, 2
      %p146 = por %p144, %p145
      %p147 = scmp.ne.s32.totalorder %s136, %s137
      %p148 = scmp.eq.s32.totalorder %s24, 0
      %p149 = por %p147, %p148
      %p150 = scmp.ne.s32.totalorder %s136, %s137
      %p151 = scmp.eq.s32.totalorder %s25, 2
      %p152 = por %p150, %p151
      %p154 = scmp.ne.s32.totalorder %s137, %s153
      %p155 = scmp.eq.s32.totalorder %s25, 0
      %p156 = por %p154, %p155
      %s157 = ssub.s32 %s19, %s26
      %p158 = scmp.eq.s32.totalorder %s157, 0
      %s160 = sadd.s32 %s159, 1
      %s161 = scalar_select %p158, %s159, %s160
      %p164 = pneg %p158
      %p165 = scmp.eq.s32.totalorder %s19, 2
      %p166 = por %p164, %p165
      %p167 = scmp.ne.s32.totalorder %s159, %s162
      %p168 = scmp.eq.s32.totalorder %s19, 0
      %p169 = por %p167, %p168
      %p170 = scmp.ne.s32.totalorder %s159, %s162
      %p171 = scmp.eq.s32.totalorder %s24, 2
      %p172 = por %p170, %p171
      %p173 = scmp.ne.s32.totalorder %s162, %s163
      %p174 = scmp.eq.s32.totalorder %s24, 0
      %p175 = por %p173, %p174
      %p176 = scmp.ne.s32.totalorder %s162, %s163
      %p177 = scmp.eq.s32.totalorder %s25, 2
      %p178 = por %p176, %p177
      %p180 = scmp.ne.s32.totalorder %s163, %s179
      %p181 = scmp.eq.s32.totalorder %s25, 0
      %p182 = por %p180, %p181
      %s183 = ssub.s32 %s19, %s26
      %p184 = scmp.eq.s32.totalorder %s183, 0
      %s186 = sadd.s32 %s185, 1
      %s187 = scalar_select %p184, %s185, %s186
      %p190 = pneg %p184
      %p191 = scmp.eq.s32.totalorder %s19, 2
      %p192 = por %p190, %p191
      %p193 = scmp.ne.s32.totalorder %s185, %s188
      %p194 = scmp.eq.s32.totalorder %s19, 0
      %p195 = por %p193, %p194
      %p196 = scmp.ne.s32.totalorder %s185, %s188
      %p197 = scmp.eq.s32.totalorder %s24, 2
      %p198 = por %p196, %p197
      %p199 = scmp.ne.s32.totalorder %s188, %s189
      %p200 = scmp.eq.s32.totalorder %s24, 0
      %p201 = por %p199, %p200
      %p202 = scmp.ne.s32.totalorder %s188, %s189
      %p203 = scmp.eq.s32.totalorder %s25, 2
      %p204 = por %p202, %p203
      %p206 = scmp.ne.s32.totalorder %s189, %s205
      %p207 = scmp.eq.s32.totalorder %s25, 0
      %p208 = por %p206, %p207
      %s209 = ssub.s32 %s19, %s26
      %p210 = scmp.eq.s32.totalorder %s209, 0
      %s212 = sadd.s32 %s211, 1
      %s213 = scalar_select %p210, %s211, %s212
      %p216 = pneg %p210
      %p217 = scmp.eq.s32.totalorder %s19, 2
      %p218 = por %p216, %p217
      %p219 = scmp.ne.s32.totalorder %s211, %s214
      %p220 = scmp.eq.s32.totalorder %s19, 0
      %p221 = por %p219, %p220
      %p222 = scmp.ne.s32.totalorder %s211, %s214
      %p223 = scmp.eq.s32.totalorder %s24, 2
      %p224 = por %p222, %p223
      %p225 = scmp.ne.s32.totalorder %s214, %s215
      %p226 = scmp.eq.s32.totalorder %s24, 0
      %p227 = por %p225, %p226
      %p228 = scmp.ne.s32.totalorder %s214, %s215
      %p229 = scmp.eq.s32.totalorder %s25, 2
      %p230 = por %p228, %p229
      %p232 = scmp.ne.s32.totalorder %s215, %s231
      %p233 = scmp.eq.s32.totalorder %s25, 0
      %p234 = por %p232, %p233
      %s235 = ssub.s32 %s19, %s26
      %p236 = scmp.eq.s32.totalorder %s235, 0
      %s238 = sadd.s32 %s237, 1
      %s239 = scalar_select %p236, %s237, %s238
      %p242 = pneg %p236
      %p243 = scmp.eq.s32.totalorder %s19, 2
      %p244 = por %p242, %p243
      %p245 = scmp.ne.s32.totalorder %s237, %s240
      %p246 = scmp.eq.s32.totalorder %s19, 0
      %p247 = por %p245, %p246
      %p248 = scmp.ne.s32.totalorder %s237, %s240
      %p249 = scmp.eq.s32.totalorder %s24, 2
      %p250 = por %p248, %p249
      %p251 = scmp.ne.s32.totalorder %s240, %s241
      %p252 = scmp.eq.s32.totalorder %s24, 0
      %p253 = por %p251, %p252
      %p254 = scmp.ne.s32.totalorder %s240, %s241
      %p255 = scmp.eq.s32.totalorder %s25, 2
      %p256 = por %p254, %p255
      %p258 = scmp.ne.s32.totalorder %s241, %s257
      %p259 = scmp.eq.s32.totalorder %s25, 0
      %p260 = por %p258, %p259
      %s262 = sadd.s32 %s261, 1
      %p265 = scmp.eq.s32.totalorder %s19, 2
      %p266 = scmp.ne.s32.totalorder %s261, %s263
      %p267 = scmp.eq.s32.totalorder %s19, 0
      %p268 = por %p266, %p267
      %p269 = scmp.ne.s32.totalorder %s261, %s263
      %p270 = scmp.eq.s32.totalorder %s24, 2
      %p271 = por %p269, %p270
      %p272 = scmp.ne.s32.totalorder %s263, %s264
      %p273 = scmp.eq.s32.totalorder %s24, 0
      %p274 = por %p272, %p273
      %p275 = scmp.ne.s32.totalorder %s263, %s264
      %p276 = scmp.eq.s32.totalorder %s25, 2
      %p277 = por %p275, %p276
      %p279 = scmp.ne.s32.totalorder %s264, %s278
      %p280 = scmp.eq.s32.totalorder %s25, 0
      %p281 = por %p279, %p280
      %s282 = ssub.s32 %s19, %s26
      %p283 = scmp.eq.s32.totalorder %s282, 0
      %s285 = sadd.s32 %s284, 1
      %s286 = scalar_select %p283, %s284, %s285
      %p289 = pneg %p283
      %p290 = scmp.eq.s32.totalorder %s19, 2
      %p291 = por %p289, %p290
      %p292 = scmp.ne.s32.totalorder %s284, %s287
      %p293 = scmp.eq.s32.totalorder %s19, 0
      %p294 = por %p292, %p293
      %p295 = scmp.ne.s32.totalorder %s284, %s287
      %p296 = scmp.eq.s32.totalorder %s24, 2
      %p297 = por %p295, %p296
      %p298 = scmp.ne.s32.totalorder %s287, %s288
      %p299 = scmp.eq.s32.totalorder %s24, 0
      %p300 = por %p298, %p299
      %p301 = scmp.ne.s32.totalorder %s287, %s288
      %p302 = scmp.eq.s32.totalorder %s25, 2
      %p303 = por %p301, %p302
      %p305 = scmp.ne.s32.totalorder %s288, %s304
      %p306 = scmp.eq.s32.totalorder %s25, 0
      %p307 = por %p305, %p306
      %p308 = scmp.le.s32.totalorder 1, %s19
      %p309 = scmp.lt.s32.totalorder %s19, 4
      %p310 = pnand %p308, %p309
      %p311 = pneg %p310
      // Predicated region
      $region9: #{_reltr_fused_losses.1} parent=5 // pred_check
        _
      $region10: #{_reltr_fused_losses.1} parent=5 // pred_check_branch
        %313 = sbr.rel (%p310) target = $region12
      $region11: #{_reltr_fused_losses.1} parent=5 // pred_region
        %s314 = ssub.s32 %s19, 1
        // Predicated region
        $region13: #{_reltr_fused_losses.1} parent=11 // pred_check
          %p315 = pneg %p274
        $region14: #{_reltr_fused_losses.1} parent=11 // pred_check_branch
          %317 = sbr.rel (%p315) target = $region16
        $region15: #{_reltr_fused_losses.1} parent=11 // pred_region
          _
        $region16: #{_reltr_fused_losses.1} parent=11 // pred_fallthru
          _
      $region12: #{_reltr_fused_losses.1} parent=5 // pred_fallthru
        _
      %p318 = scmp.lt.s32.totalorder %s19, 3
      // Predicated region
      $region17: #{_reltr_fused_losses.1} parent=5 // pred_check
        %p319 = pneg %p318
      $region18: #{_reltr_fused_losses.1} parent=5 // pred_check_branch
        %321 = sbr.rel (%p319) target = $region20
      $region19: #{_reltr_fused_losses.1} parent=5 // pred_region
        // Predicated region
        $region21: #{_reltr_fused_losses.1} parent=19 // pred_check
          %p322 = pneg %p39
        $region22: #{_reltr_fused_losses.1} parent=19 // pred_check_branch
          %324 = sbr.rel (%p322) target = $region24
        $region23: #{_reltr_fused_losses.1} parent=19 // pred_region
          %p325 = scmp.lt.s32.totalorder %s19, 2
          %s326 = scalar_select %p325, %s19, 2
          %s327 = smul.addr %s326, 2
          %s328 = smul.addr %s327, 8
          %s329 = scalar_lea.vmem %s0, %s328
        $region24: #{_reltr_fused_losses.1} parent=19 // pred_fallthru
          _
        // Predicated region
        $region25: #{_reltr_fused_losses.1} parent=19 // pred_check
          %p330 = pneg %p65
        $region26: #{_reltr_fused_losses.1} parent=19 // pred_check_branch
          %332 = sbr.rel (%p330) target = $region28
        $region27: #{_reltr_fused_losses.1} parent=19 // pred_region
          %p333 = scmp.lt.s32.totalorder %s19, 2
          %s334 = scalar_select %p333, %s19, 2
          %s335 = smul.addr %s334, 2
          %s336 = smul.addr %s335, 8
          %s337 = scalar_lea.vmem %s1, %s336
        $region28: #{_reltr_fused_losses.1} parent=19 // pred_fallthru
          _
        // Predicated region
        $region29: #{_reltr_fused_losses.1} parent=19 // pred_check
          %p338 = pneg %p91
        $region30: #{_reltr_fused_losses.1} parent=19 // pred_check_branch
          %340 = sbr.rel (%p338) target = $region32
        $region31: #{_reltr_fused_losses.1} parent=19 // pred_region
          %p341 = scmp.lt.s32.totalorder %s19, 2
          %s342 = scalar_select %p341, %s19, 2
          %s343 = smul.addr %s342, 2
          %s344 = smul.addr %s343, 8
          %s345 = scalar_lea.vmem %s2, %s344
        $region32: #{_reltr_fused_losses.1} parent=19 // pred_fallthru
          _
        // Predicated region
        $region33: #{_reltr_fused_losses.1} parent=19 // pred_check
          %p346 = pneg %p117
        $region34: #{_reltr_fused_losses.1} parent=19 // pred_check_branch
          %348 = sbr.rel (%p346) target = $region36
        $region35: #{_reltr_fused_losses.1} parent=19 // pred_region
          %p349 = scmp.lt.s32.totalorder %s19, 2
          %s350 = scalar_select %p349, %s19, 2
          %s351 = smul.addr %s350, 2
          %s352 = smul.addr %s351, 8
          %s353 = scalar_lea.vmem %s3, %s352
        $region36: #{_reltr_fused_losses.1} parent=19 // pred_fallthru
          _
        // Predicated region
        $region37: #{_reltr_fused_losses.1} parent=19 // pred_check
          %p354 = pneg %p143
        $region38: #{_reltr_fused_losses.1} parent=19 // pred_check_branch
          %356 = sbr.rel (%p354) target = $region40
        $region39: #{_reltr_fused_losses.1} parent=19 // pred_region
          %p357 = scmp.lt.s32.totalorder %s19, 2
          %s358 = scalar_select %p357, %s19, 2
          %s359 = smul.addr %s358, 2
          %s360 = smul.addr %s359, 8
          %s361 = scalar_lea.vmem %s4, %s360
        $region40: #{_reltr_fused_losses.1} parent=19 // pred_fallthru
          _
        // Predicated region
        $region41: #{_reltr_fused_losses.1} parent=19 // pred_check
          %p362 = pneg %p169
        $region42: #{_reltr_fused_losses.1} parent=19 // pred_check_branch
          %364 = sbr.rel (%p362) target = $region44
        $region43: #{_reltr_fused_losses.1} parent=19 // pred_region
          %p365 = scmp.lt.s32.totalorder %s19, 2
          %s366 = scalar_select %p365, %s19, 2
          %s367 = smul.addr %s366, 2
          %s368 = smul.addr %s367, 8
          %s369 = scalar_lea.vmem %s5, %s368
        $region44: #{_reltr_fused_losses.1} parent=19 // pred_fallthru
          _
        // Predicated region
        $region45: #{_reltr_fused_losses.1} parent=19 // pred_check
          %p370 = pneg %p195
        $region46: #{_reltr_fused_losses.1} parent=19 // pred_check_branch
          %372 = sbr.rel (%p370) target = $region48
        $region47: #{_reltr_fused_losses.1} parent=19 // pred_region
          %p373 = scmp.lt.s32.totalorder %s19, 2
          %s374 = scalar_select %p373, %s19, 2
          %s375 = smul.addr %s374, 2
          %s376 = smul.addr %s375, 8
          %s377 = scalar_lea.vmem %s6, %s376
        $region48: #{_reltr_fused_losses.1} parent=19 // pred_fallthru
          _
        // Predicated region
        $region49: #{_reltr_fused_losses.1} parent=19 // pred_check
          %p378 = pneg %p221
        $region50: #{_reltr_fused_losses.1} parent=19 // pred_check_branch
          %380 = sbr.rel (%p378) target = $region52
        $region51: #{_reltr_fused_losses.1} parent=19 // pred_region
          %p381 = scmp.lt.s32.totalorder %s19, 2
          %s382 = scalar_select %p381, %s19, 2
          %s383 = smul.addr %s382, 2
          %s384 = smul.addr %s383, 8
          %s385 = scalar_lea.vmem %s7, %s384
        $region52: #{_reltr_fused_losses.1} parent=19 // pred_fallthru
          _
        // Predicated region
        $region53: #{_reltr_fused_losses.1} parent=19 // pred_check
          %p386 = pneg %p247
        $region54: #{_reltr_fused_losses.1} parent=19 // pred_check_branch
          %388 = sbr.rel (%p386) target = $region56
        $region55: #{_reltr_fused_losses.1} parent=19 // pred_region
          %p389 = scmp.lt.s32.totalorder %s19, 2
          %s390 = scalar_select %p389, %s19, 2
          %s391 = smul.addr %s390, 8
          %s392 = scalar_lea.vmem %s8, %s391
        $region56: #{_reltr_fused_losses.1} parent=19 // pred_fallthru
          _
      $region20: #{_reltr_fused_losses.1} parent=5 // pred_fallthru
        _
      %p393 = scmp.le.s32.totalorder 1, %s19
      %p394 = scmp.lt.s32.totalorder %s19, 4
      %p395 = pnand %p393, %p394
      %p396 = pneg %p395
      // Predicated region
      $region57: #{_reltr_fused_losses.1} parent=5 // pred_check
        _
      $region58: #{_reltr_fused_losses.1} parent=5 // pred_check_branch
        %398 = sbr.rel (%p395) target = $region60
      $region59: #{_reltr_fused_losses.1} parent=5 // pred_region
        %s399 = ssub.s32 %s19, 1
        %p400 = scmp.lt.s32.totalorder %s24, 2
        %s401 = scalar_select %p400, %s24, 2
        %s402 = smul.addr %s401, 2
        %s403 = smul.addr %s402, 8
        %s404 = scalar_lea.vmem %s0, %s403
        %p405 = pneg %p45
        %p406 = pneg %p42
        %p407 = scmp.lt.s32.totalorder %s24, 2
        %s408 = scalar_select %p407, %s24, 2
        %s409 = smul.addr %s408, 2
        %s410 = smul.addr %s409, 8
        %s411 = scalar_lea.vmem %s1, %s410
        %p412 = pneg %p71
        %p413 = pneg %p68
        %p414 = scmp.lt.s32.totalorder %s24, 2
        %s415 = scalar_select %p414, %s24, 2
        %s416 = smul.addr %s415, 2
        %s417 = smul.addr %s416, 8
        %s418 = scalar_lea.vmem %s2, %s417
        %p419 = pneg %p97
        %p420 = pneg %p94
        %p421 = scmp.lt.s32.totalorder %s24, 2
        %s422 = scalar_select %p421, %s24, 2
        %s423 = smul.addr %s422, 2
        %s424 = smul.addr %s423, 8
        %s425 = scalar_lea.vmem %s3, %s424
        %p426 = pneg %p123
        %p427 = pneg %p120
        %p428 = scmp.lt.s32.totalorder %s24, 2
        %s429 = scalar_select %p428, %s24, 2
        %s430 = smul.addr %s429, 2
        %s431 = smul.addr %s430, 8
        %s432 = scalar_lea.vmem %s4, %s431
        %p433 = pneg %p149
        %p434 = pneg %p146
        %p435 = scmp.lt.s32.totalorder %s24, 2
        %s436 = scalar_select %p435, %s24, 2
        %s437 = smul.addr %s436, 2
        %s438 = smul.addr %s437, 8
        %s439 = scalar_lea.vmem %s5, %s438
        %p440 = pneg %p175
        %p441 = pneg %p172
        %p442 = scmp.lt.s32.totalorder %s24, 2
        %s443 = scalar_select %p442, %s24, 2
        %s444 = smul.addr %s443, 2
        %s445 = smul.addr %s444, 8
        %s446 = scalar_lea.vmem %s6, %s445
        %p447 = pneg %p201
        %p448 = pneg %p198
        %p449 = scmp.lt.s32.totalorder %s24, 2
        %s450 = scalar_select %p449, %s24, 2
        %s451 = smul.addr %s450, 2
        %s452 = smul.addr %s451, 8
        %s453 = scalar_lea.vmem %s7, %s452
        %p454 = pneg %p227
        %p455 = pneg %p224
        %p456 = scmp.lt.s32.totalorder %s24, 2
        %s457 = scalar_select %p456, %s24, 2
        %s458 = smul.addr %s457, 8
        %s459 = scalar_lea.vmem %s8, %s458
        %p460 = pneg %p253
        %p461 = pneg %p250
        %p462 = pneg %p274
        %p463 = pneg %p271
        %p464 = pneg %p300
        %p465 = pneg %p297
        %s466 = sand.u32 %s287, 1
        %s467 = scalar_lea.sflag [#allocation3], %s466
        %s468 = sand.u32 %s287, 1
        %s469 = smul.addr %s468, 128
        %s470 = scalar_lea.smem [#allocation2], %s469
        %p471 = scmp.lt.s32.totalorder %s24, 2
        %s472 = scalar_select %p471, %s24, 2
        %s473 = smul.addr %s472, 2
        %s474 = smul.addr %s473, 8
        %s475 = scalar_lea.vmem %s0, %s474
        %p476 = scmp.lt.s32.totalorder %s24, 2
        %s477 = scalar_select %p476, %s24, 2
        %s478 = smul.addr %s477, 2
        %s479 = smul.addr %s478, 8
        %s480 = scalar_lea.vmem %s1, %s479
        %p481 = scmp.lt.s32.totalorder %s24, 2
        %s482 = scalar_select %p481, %s24, 2
        %s483 = smul.addr %s482, 2
        %s484 = smul.addr %s483, 8
        %s485 = scalar_lea.vmem %s2, %s484
        %p486 = scmp.lt.s32.totalorder %s24, 2
        %s487 = scalar_select %p486, %s24, 2
        %s488 = smul.addr %s487, 2
        %s489 = smul.addr %s488, 8
        %s490 = scalar_lea.vmem %s3, %s489
        %p491 = scmp.lt.s32.totalorder %s24, 2
        %s492 = scalar_select %p491, %s24, 2
        %s493 = smul.addr %s492, 2
        %s494 = smul.addr %s493, 8
        %s495 = scalar_lea.vmem %s4, %s494
        %p496 = scmp.lt.s32.totalorder %s24, 2
        %s497 = scalar_select %p496, %s24, 2
        %s498 = smul.addr %s497, 2
        %s499 = smul.addr %s498, 8
        %s500 = scalar_lea.vmem %s5, %s499
        %p501 = scmp.lt.s32.totalorder %s24, 2
        %s502 = scalar_select %p501, %s24, 2
        %s503 = smul.addr %s502, 2
        %s504 = smul.addr %s503, 8
        %s505 = scalar_lea.vmem %s6, %s504
        %p506 = scmp.lt.s32.totalorder %s24, 2
        %s507 = scalar_select %p506, %s24, 2
        %s508 = smul.addr %s507, 2
        %s509 = smul.addr %s508, 8
        %s510 = scalar_lea.vmem %s7, %s509
        %p511 = scmp.lt.s32.totalorder %s24, 2
        %s512 = scalar_select %p511, %s24, 2
        %s513 = smul.addr %s512, 8
        %s514 = scalar_lea.vmem %s8, %s513
        %v515 = vld [vmem:[%s480] sm:$0xff]
        %v516 = vld [vmem:[%s480 + $0x8] sm:$0xff]
        %v517 = vld [vmem:[%s475] sm:$0xff]
        %v518 = vld [vmem:[%s475 + $0x8] sm:$0xff]
        %v519 = vcvt.f32.s32.to.zero.pseudo %v515
        %v520 = vcvt.f32.s32.to.zero.pseudo %v516
        %v521 = vlaneseq
        %v522 = vand.u32 %v521, 127
        %523 = vset.pattern.permute.xlu0 0
        %524 = vperm.xlu0 %523, %v519
        %v525 = vpop.permute.xlu0 %524
        %526 = vset.pattern.permute.xlu0 0
        %527 = vperm.xlu0 %526, %v520
        %v528 = vpop.permute.xlu0 %527
        %vm529 = vcmp.eq.s32.totalorder %v522, %v525
        %vm530 = vcmp.eq.s32.totalorder %v522, %v528
        %v531 = vsel %vm529, 1, 0
        %v532 = vsel %vm530, 1, 0
        %v533 = vcvt.s32.f32 %v531
        %v534 = vcvt.s32.f32 %v532
        %vm535 = vcmask 89088
        %v536 = vsel %vm535, %v517, -inf
        %537 = vmax.xlane.f32.xlu0 %v536
        %v538 = vpop.xlane.xlu0 %537
        %v539 = vsel %vm535, %v518, -inf
        %540 = vmax.xlane.f32.xlu0 %v539
        %v541 = vpop.xlane.xlu0 %540
        %v542 = vsub.f32 %v517, %v538
        %v543 = vsub.f32 %v518, %v541
        %v544 = vmul.f32 %v542, 1.442695
        %v545 = vpow.pop %v544
        %v546 = vmul.f32 %v543, 1.442695
        %v547 = vpow.pop %v546
        %v548 = vsel %vm535, %v545, 0.0
        %549 = vadd.xlane.f32.xlu0 %v548
        %v550 = vpop.xlane.xlu0 %549
        %v551 = vsel %vm535, %v547, 0.0
        %552 = vadd.xlane.f32.xlu0 %v551
        %v553 = vpop.xlane.xlu0 %552
        %v554 = vlog2.pop %v550
        %v555 = vmul.f32 %v554, 0.6931472
        %v556 = vlog2.pop %v553
        %v557 = vmul.f32 %v556, 0.6931472
        %v558 = vadd.f32 %v555, %v538
        %v559 = vadd.f32 %v557, %v541
        %v560 = vmul.f32 %v517, %v533
        %v561 = vmul.f32 %v518, %v534
        %v562 = vsel %vm535, %v560, 0.0
        %563 = vadd.xlane.f32.xlu0 %v562
        %v564 = vpop.xlane.xlu0 %563
        %v565 = vsel %vm535, %v561, 0.0
        %566 = vadd.xlane.f32.xlu0 %v565
        %v567 = vpop.xlane.xlu0 %566
        %v568 = vsub.f32 %v558, %v564
        %v569 = vsub.f32 %v559, %v567
        %572 = vrot.lane.b32.xlu0 %v515, 1
        %v573 = vpop.permute.xlu0 %572
        %574 = vrot.lane.b32.xlu0 %v516, 1
        %v575 = vpop.permute.xlu0 %574
        %v578 = vmul.f32 %v515, %v573
        %v579 = vmul.f32 %v516, %v575
        %v580 = vmul.f32 %v578, %v568
        %v581 = vmul.f32 %v579, %v569
        %584 = vrot.lane.b32.xlu0 %v580, 126
        %v585 = vpop.permute.xlu0 %584
        %586 = vrot.lane.b32.xlu0 %v581, 126
        %v587 = vpop.permute.xlu0 %586
        %vm590 = vcmask 7168
        %v591 = vsel %vm590, %v585, 0.0
        %v592 = vsel %vm590, %v587, 0.0
        %v593 = vadd.f32 %v591, %v592
        %594 = vadd.xlane.f32.xlu0 %v593
        %v595 = vpop.xlane.xlu0 %594
        %v596 = vrot.slane %v595, 4
        %v597 = vadd.f32 %v595, %v596
        %v598 = vrot.slane %v597, 2
        %v599 = vadd.f32 %v597, %v598
        %v600 = vrot.slane %v599, 1
        %v601 = vadd.f32 %v599, %v600
        %s602 = vtos %v601
        %603 = vrot.lane.b32.xlu0 %v515, 126
        %v604 = vpop.permute.xlu0 %603
        %605 = vrot.lane.b32.xlu0 %v516, 126
        %v606 = vpop.permute.xlu0 %605
        %v609 = vsel %vm590, %v604, 0.0
        %v610 = vsel %vm590, %v606, 0.0
        %v611 = vadd.f32 %v609, %v610
        %612 = vadd.xlane.f32.xlu0 %v611
        %v613 = vpop.xlane.xlu0 %612
        %v614 = vrot.slane %v613, 4
        %v615 = vadd.f32 %v613, %v614
        %v616 = vrot.slane %v615, 2
        %v617 = vadd.f32 %v615, %v616
        %v618 = vrot.slane %v617, 1
        %v619 = vadd.f32 %v617, %v618
        %s620 = vtos %v619
        %v621 = vcvt.s32.f32 %v522
        %vm622 = vcmp.ge.f32.partialorder %v517, %v538
        %vm623 = vcmp.ge.f32.partialorder %v518, %v541
        %v624 = vsel %vm622, %v621, 11.0
        %v625 = vsel %vm623, %v621, 11.0
        %v626 = vsel %vm535, %v624, inf
        %627 = vmin.xlane.f32.xlu0 %v626
        %v628 = vpop.xlane.xlu0 %627
        %v629 = vsel %vm535, %v625, inf
        %630 = vmin.xlane.f32.xlu0 %v629
        %v631 = vpop.xlane.xlu0 %630
        %v632 = vcvt.f32.s32.to.zero.pseudo %v628
        %v633 = vcvt.f32.s32.to.zero.pseudo %v631
        %vm634 = vcmp.eq.s32.totalorder %v632, %v519
        %vm635 = vcmp.eq.s32.totalorder %v633, %v520
        %v636 = vsel %vm634, 1, 0
        %v637 = vsel %vm635, 1, 0
        %v638 = vcvt.s32.f32 %v636
        %v639 = vcvt.s32.f32 %v637
        %640 = vrot.lane.b32.xlu0 %v515, 125
        %v641 = vpop.permute.xlu0 %640
        %642 = vrot.lane.b32.xlu0 %v516, 125
        %v643 = vpop.permute.xlu0 %642
        %v646 = vmul.f32 %v638, %v641
        %v647 = vmul.f32 %v639, %v643
        %v648 = vsel %vm590, %v646, 0.0
        %v649 = vsel %vm590, %v647, 0.0
        %v650 = vadd.f32 %v648, %v649
        %651 = vadd.xlane.f32.xlu0 %v650
        %v652 = vpop.xlane.xlu0 %651
        %v653 = vrot.slane %v652, 4
        %v654 = vadd.f32 %v652, %v653
        %v655 = vrot.slane %v654, 2
        %v656 = vadd.f32 %v654, %v655
        %v657 = vrot.slane %v656, 1
        %v658 = vadd.f32 %v656, %v657
        %s659 = vtos %v658
        %v660 = vld [vmem:[%s490] sm:$0xff]
        %v661 = vld [vmem:[%s490 + $0x8] sm:$0xff]
        %v662 = vld [vmem:[%s485] sm:$0xff]
        %v663 = vld [vmem:[%s485 + $0x8] sm:$0xff]
        %v664 = vcvt.f32.s32.to.zero.pseudo %v660
        %v665 = vcvt.f32.s32.to.zero.pseudo %v661
        %666 = vset.pattern.permute.xlu0 0
        %667 = vperm.xlu0 %666, %v664
        %v668 = vpop.permute.xlu0 %667
        %669 = vset.pattern.permute.xlu0 0
        %670 = vperm.xlu0 %669, %v665
        %v671 = vpop.permute.xlu0 %670
        %vm672 = vcmp.eq.s32.totalorder %v522, %v668
        %vm673 = vcmp.eq.s32.totalorder %v522, %v671
        %v674 = vsel %vm672, 1, 0
        %v675 = vsel %vm673, 1, 0
        %v676 = vcvt.s32.f32 %v674
        %v677 = vcvt.s32.f32 %v675
        %v678 = vsel %vm535, %v662, -inf
        %679 = vmax.xlane.f32.xlu0 %v678
        %v680 = vpop.xlane.xlu0 %679
        %v681 = vsel %vm535, %v663, -inf
        %682 = vmax.xlane.f32.xlu0 %v681
        %v683 = vpop.xlane.xlu0 %682
        %v684 = vsub.f32 %v662, %v680
        %v685 = vsub.f32 %v663, %v683
        %v686 = vmul.f32 %v684, 1.442695
        %v687 = vpow.pop %v686
        %v688 = vmul.f32 %v685, 1.442695
        %v689 = vpow.pop %v688
        %v690 = vsel %vm535, %v687, 0.0
        %691 = vadd.xlane.f32.xlu0 %v690
        %v692 = vpop.xlane.xlu0 %691
        %v693 = vsel %vm535, %v689, 0.0
        %694 = vadd.xlane.f32.xlu0 %v693
        %v695 = vpop.xlane.xlu0 %694
        %v696 = vlog2.pop %v692
        %v697 = vmul.f32 %v696, 0.6931472
        %v698 = vlog2.pop %v695
        %v699 = vmul.f32 %v698, 0.6931472
        %v700 = vadd.f32 %v697, %v680
        %v701 = vadd.f32 %v699, %v683
        %v702 = vmul.f32 %v662, %v676
        %v703 = vmul.f32 %v663, %v677
        %v704 = vsel %vm535, %v702, 0.0
        %705 = vadd.xlane.f32.xlu0 %v704
        %v706 = vpop.xlane.xlu0 %705
        %v707 = vsel %vm535, %v703, 0.0
        %708 = vadd.xlane.f32.xlu0 %v707
        %v709 = vpop.xlane.xlu0 %708
        %v710 = vsub.f32 %v700, %v706
        %v711 = vsub.f32 %v701, %v709
        %714 = vrot.lane.b32.xlu0 %v660, 1
        %v715 = vpop.permute.xlu0 %714
        %716 = vrot.lane.b32.xlu0 %v661, 1
        %v717 = vpop.permute.xlu0 %716
        %v720 = vmul.f32 %v660, %v715
        %v721 = vmul.f32 %v661, %v717
        %v722 = vmul.f32 %v720, %v710
        %v723 = vmul.f32 %v721, %v711
        %726 = vrot.lane.b32.xlu0 %v722, 126
        %v727 = vpop.permute.xlu0 %726
        %728 = vrot.lane.b32.xlu0 %v723, 126
        %v729 = vpop.permute.xlu0 %728
        %v732 = vsel %vm590, %v727, 0.0
        %v733 = vsel %vm590, %v729, 0.0
        %v734 = vadd.f32 %v732, %v733
        %735 = vadd.xlane.f32.xlu0 %v734
        %v736 = vpop.xlane.xlu0 %735
        %v737 = vrot.slane %v736, 4
        %v738 = vadd.f32 %v736, %v737
        %v739 = vrot.slane %v738, 2
        %v740 = vadd.f32 %v738, %v739
        %v741 = vrot.slane %v740, 1
        %v742 = vadd.f32 %v740, %v741
        %s743 = vtos %v742
        %744 = vrot.lane.b32.xlu0 %v660, 126
        %v745 = vpop.permute.xlu0 %744
        %746 = vrot.lane.b32.xlu0 %v661, 126
        %v747 = vpop.permute.xlu0 %746
        %v750 = vsel %vm590, %v745, 0.0
        %v751 = vsel %vm590, %v747, 0.0
        %v752 = vadd.f32 %v750, %v751
        %753 = vadd.xlane.f32.xlu0 %v752
        %v754 = vpop.xlane.xlu0 %753
        %v755 = vrot.slane %v754, 4
        %v756 = vadd.f32 %v754, %v755
        %v757 = vrot.slane %v756, 2
        %v758 = vadd.f32 %v756, %v757
        %v759 = vrot.slane %v758, 1
        %v760 = vadd.f32 %v758, %v759
        %s761 = vtos %v760
        %vm762 = vcmp.ge.f32.partialorder %v662, %v680
        %vm763 = vcmp.ge.f32.partialorder %v663, %v683
        %v764 = vsel %vm762, %v621, 11.0
        %v765 = vsel %vm763, %v621, 11.0
        %v766 = vsel %vm535, %v764, inf
        %767 = vmin.xlane.f32.xlu0 %v766
        %v768 = vpop.xlane.xlu0 %767
        %v769 = vsel %vm535, %v765, inf
        %770 = vmin.xlane.f32.xlu0 %v769
        %v771 = vpop.xlane.xlu0 %770
        %v772 = vcvt.f32.s32.to.zero.pseudo %v768
        %v773 = vcvt.f32.s32.to.zero.pseudo %v771
        %vm774 = vcmp.eq.s32.totalorder %v772, %v664
        %vm775 = vcmp.eq.s32.totalorder %v773, %v665
        %v776 = vsel %vm774, 1, 0
        %v777 = vsel %vm775, 1, 0
        %v778 = vcvt.s32.f32 %v776
        %v779 = vcvt.s32.f32 %v777
        %780 = vrot.lane.b32.xlu0 %v660, 125
        %v781 = vpop.permute.xlu0 %780
        %782 = vrot.lane.b32.xlu0 %v661, 125
        %v783 = vpop.permute.xlu0 %782
        %v786 = vmul.f32 %v778, %v781
        %v787 = vmul.f32 %v779, %v783
        %v788 = vsel %vm590, %v786, 0.0
        %v789 = vsel %vm590, %v787, 0.0
        %v790 = vadd.f32 %v788, %v789
        %791 = vadd.xlane.f32.xlu0 %v790
        %v792 = vpop.xlane.xlu0 %791
        %v793 = vrot.slane %v792, 4
        %v794 = vadd.f32 %v792, %v793
        %v795 = vrot.slane %v794, 2
        %v796 = vadd.f32 %v794, %v795
        %v797 = vrot.slane %v796, 1
        %v798 = vadd.f32 %v796, %v797
        %s799 = vtos %v798
        %v800 = vld [vmem:[%s500] sm:$0xff]
        %v801 = vld [vmem:[%s500 + $0x8] sm:$0xff]
        %v802 = vld [vmem:[%s495] sm:$0xff]
        %v803 = vld [vmem:[%s495 + $0x8] sm:$0xff]
        %v804 = vcvt.f32.s32.to.zero.pseudo %v800
        %v805 = vcvt.f32.s32.to.zero.pseudo %v801
        %806 = vset.pattern.permute.xlu0 0
        %807 = vperm.xlu0 %806, %v804
        %v808 = vpop.permute.xlu0 %807
        %809 = vset.pattern.permute.xlu0 0
        %810 = vperm.xlu0 %809, %v805
        %v811 = vpop.permute.xlu0 %810
        %vm812 = vcmp.eq.s32.totalorder %v522, %v808
        %vm813 = vcmp.eq.s32.totalorder %v522, %v811
        %v814 = vsel %vm812, 1, 0
        %v815 = vsel %vm813, 1, 0
        %v816 = vcvt.s32.f32 %v814
        %v817 = vcvt.s32.f32 %v815
        %v818 = vsel %vm535, %v802, -inf
        %819 = vmax.xlane.f32.xlu0 %v818
        %v820 = vpop.xlane.xlu0 %819
        %v821 = vsel %vm535, %v803, -inf
        %822 = vmax.xlane.f32.xlu0 %v821
        %v823 = vpop.xlane.xlu0 %822
        %v824 = vsub.f32 %v802, %v820
        %v825 = vsub.f32 %v803, %v823
        %v826 = vmul.f32 %v824, 1.442695
        %v827 = vpow.pop %v826
        %v828 = vmul.f32 %v825, 1.442695
        %v829 = vpow.pop %v828
        %v830 = vsel %vm535, %v827, 0.0
        %831 = vadd.xlane.f32.xlu0 %v830
        %v832 = vpop.xlane.xlu0 %831
        %v833 = vsel %vm535, %v829, 0.0
        %834 = vadd.xlane.f32.xlu0 %v833
        %v835 = vpop.xlane.xlu0 %834
        %v836 = vlog2.pop %v832
        %v837 = vmul.f32 %v836, 0.6931472
        %v838 = vlog2.pop %v835
        %v839 = vmul.f32 %v838, 0.6931472
        %v840 = vadd.f32 %v837, %v820
        %v841 = vadd.f32 %v839, %v823
        %v842 = vmul.f32 %v802, %v816
        %v843 = vmul.f32 %v803, %v817
        %v844 = vsel %vm535, %v842, 0.0
        %845 = vadd.xlane.f32.xlu0 %v844
        %v846 = vpop.xlane.xlu0 %845
        %v847 = vsel %vm535, %v843, 0.0
        %848 = vadd.xlane.f32.xlu0 %v847
        %v849 = vpop.xlane.xlu0 %848
        %v850 = vsub.f32 %v840, %v846
        %v851 = vsub.f32 %v841, %v849
        %854 = vrot.lane.b32.xlu0 %v800, 1
        %v855 = vpop.permute.xlu0 %854
        %856 = vrot.lane.b32.xlu0 %v801, 1
        %v857 = vpop.permute.xlu0 %856
        %v860 = vmul.f32 %v800, %v855
        %v861 = vmul.f32 %v801, %v857
        %v862 = vmul.f32 %v860, %v850
        %v863 = vmul.f32 %v861, %v851
        %866 = vrot.lane.b32.xlu0 %v862, 126
        %v867 = vpop.permute.xlu0 %866
        %868 = vrot.lane.b32.xlu0 %v863, 126
        %v869 = vpop.permute.xlu0 %868
        %v872 = vsel %vm590, %v867, 0.0
        %v873 = vsel %vm590, %v869, 0.0
        %v874 = vadd.f32 %v872, %v873
        %875 = vadd.xlane.f32.xlu0 %v874
        %v876 = vpop.xlane.xlu0 %875
        %v877 = vrot.slane %v876, 4
        %v878 = vadd.f32 %v876, %v877
        %v879 = vrot.slane %v878, 2
        %v880 = vadd.f32 %v878, %v879
        %v881 = vrot.slane %v880, 1
        %v882 = vadd.f32 %v880, %v881
        %s883 = vtos %v882
        %884 = vrot.lane.b32.xlu0 %v800, 126
        %v885 = vpop.permute.xlu0 %884
        %886 = vrot.lane.b32.xlu0 %v801, 126
        %v887 = vpop.permute.xlu0 %886
        %v890 = vsel %vm590, %v885, 0.0
        %v891 = vsel %vm590, %v887, 0.0
        %v892 = vadd.f32 %v890, %v891
        %893 = vadd.xlane.f32.xlu0 %v892
        %v894 = vpop.xlane.xlu0 %893
        %v895 = vrot.slane %v894, 4
        %v896 = vadd.f32 %v894, %v895
        %v897 = vrot.slane %v896, 2
        %v898 = vadd.f32 %v896, %v897
        %v899 = vrot.slane %v898, 1
        %v900 = vadd.f32 %v898, %v899
        %s901 = vtos %v900
        %vm902 = vcmp.ge.f32.partialorder %v802, %v820
        %vm903 = vcmp.ge.f32.partialorder %v803, %v823
        %v904 = vsel %vm902, %v621, 11.0
        %v905 = vsel %vm903, %v621, 11.0
        %v906 = vsel %vm535, %v904, inf
        %907 = vmin.xlane.f32.xlu0 %v906
        %v908 = vpop.xlane.xlu0 %907
        %v909 = vsel %vm535, %v905, inf
        %910 = vmin.xlane.f32.xlu0 %v909
        %v911 = vpop.xlane.xlu0 %910
        %v912 = vcvt.f32.s32.to.zero.pseudo %v908
        %v913 = vcvt.f32.s32.to.zero.pseudo %v911
        %vm914 = vcmp.eq.s32.totalorder %v912, %v804
        %vm915 = vcmp.eq.s32.totalorder %v913, %v805
        %v916 = vsel %vm914, 1, 0
        %v917 = vsel %vm915, 1, 0
        %v918 = vcvt.s32.f32 %v916
        %v919 = vcvt.s32.f32 %v917
        %920 = vrot.lane.b32.xlu0 %v800, 125
        %v921 = vpop.permute.xlu0 %920
        %922 = vrot.lane.b32.xlu0 %v801, 125
        %v923 = vpop.permute.xlu0 %922
        %v926 = vmul.f32 %v918, %v921
        %v927 = vmul.f32 %v919, %v923
        %v928 = vsel %vm590, %v926, 0.0
        %v929 = vsel %vm590, %v927, 0.0
        %v930 = vadd.f32 %v928, %v929
        %931 = vadd.xlane.f32.xlu0 %v930
        %v932 = vpop.xlane.xlu0 %931
        %v933 = vrot.slane %v932, 4
        %v934 = vadd.f32 %v932, %v933
        %v935 = vrot.slane %v934, 2
        %v936 = vadd.f32 %v934, %v935
        %v937 = vrot.slane %v936, 1
        %v938 = vadd.f32 %v936, %v937
        %s939 = vtos %v938
        %v940 = vld [vmem:[%s510] sm:$0xff]
        %v941 = vld [vmem:[%s510 + $0x8] sm:$0xff]
        %v942 = vld [vmem:[%s505] sm:$0xff]
        %v943 = vld [vmem:[%s505 + $0x8] sm:$0xff]
        %v944 = vcvt.f32.s32.to.zero.pseudo %v940
        %v945 = vcvt.f32.s32.to.zero.pseudo %v941
        %946 = vset.pattern.permute.xlu0 0
        %947 = vperm.xlu0 %946, %v944
        %v948 = vpop.permute.xlu0 %947
        %949 = vset.pattern.permute.xlu0 0
        %950 = vperm.xlu0 %949, %v945
        %v951 = vpop.permute.xlu0 %950
        %vm952 = vcmp.eq.s32.totalorder %v522, %v948
        %vm953 = vcmp.eq.s32.totalorder %v522, %v951
        %v954 = vsel %vm952, 1, 0
        %v955 = vsel %vm953, 1, 0
        %v956 = vcvt.s32.f32 %v954
        %v957 = vcvt.s32.f32 %v955
        %vm958 = vcmask 171008
        %v959 = vsel %vm958, %v942, -inf
        %960 = vmax.xlane.f32.xlu0 %v959
        %v961 = vpop.xlane.xlu0 %960
        %v962 = vsel %vm958, %v943, -inf
        %963 = vmax.xlane.f32.xlu0 %v962
        %v964 = vpop.xlane.xlu0 %963
        %v965 = vsub.f32 %v942, %v961
        %v966 = vsub.f32 %v943, %v964
        %v967 = vmul.f32 %v965, 1.442695
        %v968 = vpow.pop %v967
        %v969 = vmul.f32 %v966, 1.442695
        %v970 = vpow.pop %v969
        %v971 = vsel %vm958, %v968, 0.0
        %972 = vadd.xlane.f32.xlu0 %v971
        %v973 = vpop.xlane.xlu0 %972
        %v974 = vsel %vm958, %v970, 0.0
        %975 = vadd.xlane.f32.xlu0 %v974
        %v976 = vpop.xlane.xlu0 %975
        %v977 = vlog2.pop %v973
        %v978 = vmul.f32 %v977, 0.6931472
        %v979 = vlog2.pop %v976
        %v980 = vmul.f32 %v979, 0.6931472
        %v981 = vadd.f32 %v978, %v961
        %v982 = vadd.f32 %v980, %v964
        %v983 = vmul.f32 %v942, %v956
        %v984 = vmul.f32 %v943, %v957
        %v985 = vsel %vm958, %v983, 0.0
        %986 = vadd.xlane.f32.xlu0 %v985
        %v987 = vpop.xlane.xlu0 %986
        %v988 = vsel %vm958, %v984, 0.0
        %989 = vadd.xlane.f32.xlu0 %v988
        %v990 = vpop.xlane.xlu0 %989
        %v991 = vsub.f32 %v981, %v987
        %v992 = vsub.f32 %v982, %v990
        %995 = vrot.lane.b32.xlu0 %v940, 1
        %v996 = vpop.permute.xlu0 %995
        %997 = vrot.lane.b32.xlu0 %v941, 1
        %v998 = vpop.permute.xlu0 %997
        %v1001 = vmul.f32 %v940, %v996
        %v1002 = vmul.f32 %v941, %v998
        %v1003 = vmul.f32 %v1001, %v991
        %v1004 = vmul.f32 %v1002, %v992
        %1007 = vrot.lane.b32.xlu0 %v1003, 126
        %v1008 = vpop.permute.xlu0 %1007
        %1009 = vrot.lane.b32.xlu0 %v1004, 126
        %v1010 = vpop.permute.xlu0 %1009
        %v1013 = vsel %vm590, %v1008, 0.0
        %v1014 = vsel %vm590, %v1010, 0.0
        %v1015 = vadd.f32 %v1013, %v1014
        %1016 = vadd.xlane.f32.xlu0 %v1015
        %v1017 = vpop.xlane.xlu0 %1016
        %v1018 = vrot.slane %v1017, 4
        %v1019 = vadd.f32 %v1017, %v1018
        %v1020 = vrot.slane %v1019, 2
        %v1021 = vadd.f32 %v1019, %v1020
        %v1022 = vrot.slane %v1021, 1
        %v1023 = vadd.f32 %v1021, %v1022
        %s1024 = vtos %v1023
        %1025 = vrot.lane.b32.xlu0 %v940, 126
        %v1026 = vpop.permute.xlu0 %1025
        %1027 = vrot.lane.b32.xlu0 %v941, 126
        %v1028 = vpop.permute.xlu0 %1027
        %v1031 = vsel %vm590, %v1026, 0.0
        %v1032 = vsel %vm590, %v1028, 0.0
        %v1033 = vadd.f32 %v1031, %v1032
        %1034 = vadd.xlane.f32.xlu0 %v1033
        %v1035 = vpop.xlane.xlu0 %1034
        %v1036 = vrot.slane %v1035, 4
        %v1037 = vadd.f32 %v1035, %v1036
        %v1038 = vrot.slane %v1037, 2
        %v1039 = vadd.f32 %v1037, %v1038
        %v1040 = vrot.slane %v1039, 1
        %v1041 = vadd.f32 %v1039, %v1040
        %s1042 = vtos %v1041
        %vm1043 = vcmp.ge.f32.partialorder %v942, %v961
        %vm1044 = vcmp.ge.f32.partialorder %v943, %v964
        %v1045 = vsel %vm1043, %v621, 21.0
        %v1046 = vsel %vm1044, %v621, 21.0
        %v1047 = vsel %vm958, %v1045, inf
        %1048 = vmin.xlane.f32.xlu0 %v1047
        %v1049 = vpop.xlane.xlu0 %1048
        %v1050 = vsel %vm958, %v1046, inf
        %1051 = vmin.xlane.f32.xlu0 %v1050
        %v1052 = vpop.xlane.xlu0 %1051
        %v1053 = vcvt.f32.s32.to.zero.pseudo %v1049
        %v1054 = vcvt.f32.s32.to.zero.pseudo %v1052
        %vm1055 = vcmp.eq.s32.totalorder %v1053, %v944
        %vm1056 = vcmp.eq.s32.totalorder %v1054, %v945
        %v1057 = vsel %vm1055, 1, 0
        %v1058 = vsel %vm1056, 1, 0
        %v1059 = vcvt.s32.f32 %v1057
        %v1060 = vcvt.s32.f32 %v1058
        %v1061 = vmul.f32 %v1059, %v996
        %v1062 = vmul.f32 %v1060, %v998
        %1065 = vrot.lane.b32.xlu0 %v1061, 124
        %v1066 = vpop.permute.xlu0 %1065
        %1067 = vrot.lane.b32.xlu0 %v1062, 124
        %v1068 = vpop.permute.xlu0 %1067
        %v1071 = vsel %vm590, %v1066, 0.0
        %v1072 = vsel %vm590, %v1068, 0.0
        %v1073 = vadd.f32 %v1071, %v1072
        %1074 = vadd.xlane.f32.xlu0 %v1073
        %v1075 = vpop.xlane.xlu0 %1074
        %v1076 = vrot.slane %v1075, 4
        %v1077 = vadd.f32 %v1075, %v1076
        %v1078 = vrot.slane %v1077, 2
        %v1079 = vadd.f32 %v1077, %v1078
        %v1080 = vrot.slane %v1079, 1
        %v1081 = vadd.f32 %v1079, %v1080
        %s1082 = vtos %v1081
        %v1083 = vld [vmem:[%s9] sm:$0x1]
        %vm1084 = vcmp.ne.s32.totalorder %v1053, 20
        %vm1085 = vcmp.ne.s32.totalorder %v1054, 20
        %v1086 = vsel %vm1084, 1, 0
        %v1087 = vsel %vm1085, 1, 0
        %v1088 = vcvt.s32.f32 %v1086
        %v1089 = vcvt.s32.f32 %v1087
        %1090 = vset.pattern.permute.xlu0 5
        %1091 = vperm.xlu0 %1090, %v944
        %v1092 = vpop.permute.xlu0 %1091
        %1093 = vset.pattern.permute.xlu0 5
        %1094 = vperm.xlu0 %1093, %v945
        %v1095 = vpop.permute.xlu0 %1094
        %vm1096 = vcmp.eq.s32.totalorder %v1092, %v522
        %vm1097 = vcmp.eq.s32.totalorder %v1095, %v522
        %v1098 = vsel %vm1096, 1, 0
        %v1099 = vsel %vm1097, 1, 0
        %v1100 = vcvt.s32.f32 %v1098
        %v1101 = vcvt.s32.f32 %v1099
        %v1102 = vmul.f32 %v1088, %v1100
        %v1103 = vmul.f32 %v1089, %v1101
        %vm1104 = vcmask 15360
        %v1105 = vsel %vm1104, %v1102, 0.0
        %v1106 = vsel %vm1104, %v1103, 0.0
        %v1107 = vadd.f32 %v1105, %v1106
        %v1108 = vrot.slane %v1107, 4
        %v1109 = vadd.f32 %v1107, %v1108
        %v1110 = vrot.slane %v1109, 2
        %v1111 = vadd.f32 %v1109, %v1110
        %v1112 = vrot.slane %v1111, 1
        %v1113 = vadd.f32 %v1111, %v1112
        %v1114 = vsub.f32 %v1113, %v1083
        %v1115 = vand.u32 2147483647, %v1114
        %vm1116 = vcmask 8192
        %v1117 = vsel %vm1116, %v1115, 0.0
        %1118 = vadd.xlane.f32.xlu0 %v1117
        %v1119 = vpop.xlane.xlu0 %1118
        %v1120 = vrot.slane %v1119, 4
        %v1121 = vadd.f32 %v1119, %v1120
        %v1122 = vrot.slane %v1121, 2
        %v1123 = vadd.f32 %v1121, %v1122
        %v1124 = vrot.slane %v1123, 1
        %v1125 = vadd.f32 %v1123, %v1124
        %s1126 = vtos %v1125
        %v1127 = vld [vmem:[%s514] sm:$0xff]
        %v1129 = vrot.slane %v1127, 4
        %v1131 = vsub.f32 %v1127, %v1129
        %v1132 = vand.u32 2147483647, %v1131
        %vm1133 = vcmask 109568
        %v1134 = vsel %vm1133, %v1132, 0.0
        %1135 = vadd.xlane.f32.xlu0 %v1134
        %v1136 = vpop.xlane.xlu0 %1135
        %v1137 = vrot.slane %v1136, 4
        %v1138 = vadd.f32 %v1136, %v1137
        %v1139 = vrot.slane %v1138, 2
        %v1140 = vadd.f32 %v1138, %v1139
        %v1141 = vrot.slane %v1140, 1
        %v1142 = vadd.f32 %v1140, %v1141
        %s1143 = vtos %v1142
        %v1144 = vmul.f32 %v1127, 0.5
        %v1146 = vrot.slane %v1144, 2
        %v1148 = vsub.f32 %v1127, %v1146
        %v1149 = vadd.f32 %v1127, %v1146
        %v1150 = vsub.f32 %v1149, %v1148
        %v1152 = vrot.slane %v1150, 1
        %v1154 = vmul.f32 %v1150, %v1152
        %v1156 = vrot.slane %v1149, 4
        %v1158 = vmin.f32 %v1149, %v1156
        %v1160 = vrot.slane %v1148, 4
        %v1162 = vmax.f32 %v1148, %v1160
        %v1163 = vsub.f32 %v1158, %v1162
        %v1164 = vmax.f32 %v1163, 0.0
        %v1166 = vrot.slane %v1164, 1
        %v1168 = vmul.f32 %v1164, %v1166
        %v1170 = vrot.slane %v1154, 4
        %v1172 = vadd.f32 %v1154, %v1170
        %v1173 = vsub.f32 %v1172, %v1168
        %v1174 = vrcp.pop %v1173
        %v1175 = vmul.f32 %v1168, %v1174
        %v1176 = vmax.f32 %v1149, %v1156
        %v1177 = vmin.f32 %v1148, %v1160
        %v1178 = vsub.f32 %v1176, %v1177
        %v1180 = vrot.slane %v1178, 1
        %v1182 = vmul.f32 %v1178, %v1180
        %v1183 = vsub.f32 %v1182, %v1173
        %v1184 = vrcp.pop %v1182
        %v1185 = vmul.f32 %v1183, %v1184
        %v1186 = vsub.f32 %v1175, %v1185
        %v1187 = vsub.f32 1.0, %v1186
        %vm1188 = vcmask 106496
        %v1189 = vsel %vm1188, %v1187, 0.0
        %1190 = vadd.xlane.f32.xlu0 %v1189
        %v1191 = vpop.xlane.xlu0 %1190
        %v1192 = vrot.slane %v1191, 4
        %v1193 = vadd.f32 %v1191, %v1192
        %v1194 = vrot.slane %v1193, 2
        %v1195 = vadd.f32 %v1193, %v1194
        %v1196 = vrot.slane %v1195, 1
        %v1197 = vadd.f32 %v1195, %v1196
        %s1198 = vtos %v1197
        %s1199 = sadd.f32 %s602, %s743
        %s1200 = sadd.f32 %s1199, %s883
        %s1201 = scalar_lea.smem %s470, 0 [#allocation2]
        %1202 = sst [smem:[%s1201]] %s1200
        %s1203 = sadd.f32 %s620, %s761
        %s1204 = sadd.f32 %s1203, %s901
        %s1205 = scalar_lea.smem %s470, 1 [#allocation2]
        %1206 = sst [smem:[%s1205]] %s1204
        %s1207 = scalar_lea.smem %s470, 2 [#allocation2]
        %1208 = sst [smem:[%s1207]] %s1024
        %s1209 = scalar_lea.smem %s470, 3 [#allocation2]
        %1210 = sst [smem:[%s1209]] %s1042
        %s1211 = scalar_lea.smem %s470, 4 [#allocation2]
        %1212 = sst [smem:[%s1211]] %s1126
        %s1213 = scalar_lea.smem %s470, 5 [#allocation2]
        %1214 = sst [smem:[%s1213]] %s659
        %s1215 = scalar_lea.smem %s470, 6 [#allocation2]
        %1216 = sst [smem:[%s1215]] %s799
        %s1217 = scalar_lea.smem %s470, 7 [#allocation2]
        %1218 = sst [smem:[%s1217]] %s939
        %s1219 = scalar_lea.smem %s470, 8 [#allocation2]
        %1220 = sst [smem:[%s1219]] %s1082
        %s1221 = scalar_lea.smem %s470, 9 [#allocation2]
        %1222 = sst [smem:[%s1221]] %s1143
        %s1223 = scalar_lea.smem %s470, 10 [#allocation2]
        %1224 = sst [smem:[%s1223]] %s1198
        %s1225 = sand.u32 %s287, 1
        %s1226 = scalar_lea.sflag [#allocation3], %s1225
        %s1227 = sand.u32 %s287, 1
        %s1228 = smul.addr %s1227, 128
        %s1229 = scalar_lea.smem [#allocation2], %s1228
        // Predicated region
        $region61: #{_reltr_fused_losses.1} parent=59 // pred_check
          %p1230 = pneg %p297
        $region62: #{_reltr_fused_losses.1} parent=59 // pred_check_branch
          %1232 = sbr.rel (%p1230) target = $region64
        $region63: #{_reltr_fused_losses.1} parent=59 // pred_region
          %s1234 = ssub.s32 16, 16
          %1235 = vsyncadd %s1226, %s1234
          %s1236 = scalar_lea.vmem %s10, %s24
          %s1238 = sshll.u32 %s1236, 4
          %s1239 = int_to_ptr.vmem [resolvable:$true] %s1238
          %1241 = dma.smem_to_vmem %s1229, 16, %s1239, %s1226
        $region64: #{_reltr_fused_losses.1} parent=59 // pred_fallthru
          _
      $region60: #{_reltr_fused_losses.1} parent=5 // pred_fallthru
        _
      %p1242 = scmp.le.s32.totalorder 2, %s19
      // Predicated region
      $region65: #{_reltr_fused_losses.1} parent=5 // pred_check
        %p1243 = pneg %p1242
      $region66: #{_reltr_fused_losses.1} parent=5 // pred_check_branch
        %1245 = sbr.rel (%p1243) target = $region68
      $region67: #{_reltr_fused_losses.1} parent=5 // pred_region
        %s1246 = ssub.s32 %s19, 2
        // Predicated region
        $region69: #{_reltr_fused_losses.1} parent=67 // pred_check
          %p1247 = pneg %p303
        $region70: #{_reltr_fused_losses.1} parent=67 // pred_check_branch
          %1249 = sbr.rel (%p1247) target = $region72
        $region71: #{_reltr_fused_losses.1} parent=67 // pred_region
          %s1250 = sand.u32 %s288, 1
          %s1251 = scalar_lea.sflag [#allocation3], %s1250
          %s1252 = sand.u32 %s288, 1
          %s1253 = smul.addr %s1252, 128
          %s1254 = scalar_lea.smem [#allocation2], %s1253
          %1255 = dma.done %s1251, 16
        $region72: #{_reltr_fused_losses.1} parent=67 // pred_fallthru
          _
        %1256 = sfence
      $region68: #{_reltr_fused_losses.1} parent=5 // pred_fallthru
        _
    $region6: #{_reltr_fused_losses.1} parent=1 // loop_footer
      %s23 = sadd.s32 1, %s19
    $region7: #{_reltr_fused_losses.1} parent=1 // loop_footer_branch
      %18 = sbr.rel target = $region3
    $region8: #{_reltr_fused_losses.1} parent=1 // loop_exit
      _
    %1257 = vsyncpa [#allocation3], 1
    %s1258 = scalar_lea.sflag [#allocation3], 1
    %1259 = vsyncpa %s1258, 1

</llo_original>
